<compile_context>
chip_gen: v7x
topology: tpu7x:2x2x1
jax: 0.10.0
libtpu: 0.0.40
codegen_flags: <defaults>
</compile_context>

<pallas_src>
import numpy as np
import jax
import jax.numpy as jnp
from jax.experimental import pallas as pl
from jax.experimental.pallas import tpu as pltpu

# --- module constants (from __init__) ---
MEM_CHAN = 7
MEM_WIDTH = 20
MEM_SIZE = (2, 10, 10, 2, 10, 10, 2, 10, 10, 2)
N_NEBS_HASHED = 80
REL_VEC_WIDTH = N_NEBS_HASHED * 3 + 1  # 241
THRESH = 0.7
LANE = 128  # lane-dense output width for the hash kernel


# ----------------------------- Pallas kernel --------------------------------

def _hash_kernel(cfg_ref, w_ref, out_ref):
    # hash = Linear(rel_vec_width -> mem_chan, bias=False)(config)
    # weight is zero-padded to 128 lanes; extra lanes compute 0 and are sliced
    # off on the host, keeping the store path unmasked / lane-dense.
    h = jnp.dot(cfg_ref[...], w_ref[...], preferred_element_type=jnp.float32)
    # .long() (truncate toward zero) then .clamp(0, mem_width - 1)
    out_ref[...] = jnp.clip(h.astype(jnp.int32), 0, MEM_WIDTH - 1)


def make_hash(config, hash_w, *, n_blocks=2):
    """config: [N, 241] f32, hash_w: [7, 241] f32 (nn.Linear weight layout).
    Returns int32 [N, 7] hash indices in [0, MEM_WIDTH-1].

    n_blocks=2 keeps one parallel grid step per v7x TensorCore; on v5e/v6e the
    two steps are just two (cheap) iterations of one large block each.
    """
    n, r = config.shape

    # Lane-dense RHS: [241, 128] with the real weight in lanes 0..6, zeros after.
    wt = jnp.zeros((r, LANE), dtype=hash_w.dtype).at[:, :MEM_CHAN].set(hash_w.T)

    # Pad N so each of the n_blocks row-tiles is sublane-aligned (multiple of 8).
    tm = pl.cdiv(n, n_blocks * 8) * 8
    n_pad = tm * n_blocks
    cfg = jnp.pad(config, ((0, n_pad - n), (0, 0)))

    out = pl.pallas_call(
        _hash_kernel,
        out_shape=jax.ShapeDtypeStruct((n_pad, LANE), jnp.int32),
        grid_spec=pl.GridSpec(
            grid=(n_blocks,),
            in_specs=[
                pl.BlockSpec((tm, r), lambda i: (i, 0)),       # config row slab
                pl.BlockSpec((r, LANE), lambda i: (0, 0)),     # weight, resident
            ],
            out_specs=pl.BlockSpec((tm, LANE), lambda i: (i, 0)),
        ),
        compiler_params=pltpu.CompilerParams(
            dimension_semantics=("parallel",)),
    )(cfg, wt)
    return out[:n, :MEM_CHAN]


# ------------------------------ forward (store) ------------------------------

def store(batch, rel_vec, hash_w, mem):
    """Equivalent of Deep_Mem_RelativeLocs_ProjectedLowerDim.store()."""
    # build_relationship_vecs: thresholding of the input image. A dedicated
    # Pallas call for 512 elements is pure overhead; XLA fuses this jnp.where.
    batch_bin = jnp.where(batch > THRESH, 1.0, 0.0).astype(batch.dtype)

    # TODO(synk): samplers.OOSampler, t.ops.my_ops.frnn_ts_kernel and
    # t.ops.row_op.write_row_bind (custom CUDA ops that fill rel_vec from the
    # binarized image) have no Pallas equivalent; rel_vec is passed in
    # pre-built, matching the registered buffer's shape/dtype.
    config = rel_vec  # config = self.rel_vec.clone()

    hashed = make_hash(config, hash_w)  # [N, 7] int32 in [0, 19]

    # self.mem.index_put_(hash.split(1, dim=1), ones, accumulate=True)
    # TODO(synk): the original clamps only to [0, 19] but mem dims are {2, 10};
    # we additionally clamp per-dim to stay in bounds (semantic deviation noted),
    # and broadcast the +1 over the trailing [10, 10, 2] dims.
    dim_sizes = jnp.asarray(np.array(MEM_SIZE[:MEM_CHAN], dtype=np.int32))
    idx = jnp.minimum(hashed, dim_sizes[None, :] - 1)
    strides = np.array(
        [int(np.prod(MEM_SIZE[d + 1:MEM_CHAN])) for d in range(MEM_CHAN)],
        dtype=np.int32)
    flat_idx = jnp.sum(idx * jnp.asarray(strides)[None, :], axis=1)  # [N]

    lead = int(np.prod(MEM_SIZE[:MEM_CHAN]))            # 80_000
    trailing = MEM_SIZE[MEM_CHAN:]                       # (10, 10, 2)

    # Scalar bincount (1624 scalar scatter-adds into an 80k vector) followed by
    # a fully vectorized dense broadcast add — identical to scattering all-ones
    # [N, 10, 10, 2] tiles, but without serialized duplicate-index updates.
    counts = jnp.zeros((lead,), dtype=mem.dtype).at[flat_idx].add(1)
    mem_flat = mem.reshape((lead,) + trailing)
    mem_out = mem_flat + counts.reshape((lead,) + (1,) * len(trailing))
    return batch_bin, hashed, mem_out.reshape(MEM_SIZE)


# ----------------------------------- main ------------------------------------

if __name__ == "__main__":
    key = jax.random.PRNGKey(0)
    k_batch, k_rel, k_w = jax.random.split(key, 3)

    img_size = 16
    batch_size = 2

    # opt.mode == 'store'
    batch = jax.random.uniform(
        k_batch, (batch_size, 1, img_size, img_size), dtype=jnp.float32)

    # rel_vec buffer: [batch_size * 812, 241]  (stand-in for the custom-op fill)
    n_edges = batch_size * 812
    rel_vec = jax.random.uniform(
        k_rel, (n_edges, REL_VEC_WIDTH), dtype=jnp.float32)

    # nn.Linear(241, 7, bias=False): weight [7, 241], uniform_(0, 1) * 0.15
    hash_w = jax.random.uniform(
        k_w, (MEM_CHAN, REL_VEC_WIDTH), dtype=jnp.float32) * 0.15

    # mem buffer (t.long in PyTorch; int32 here — counts stay tiny)
    mem = jnp.zeros(MEM_SIZE, dtype=jnp.int32)

    batch_bin, hashed, mem_out = jax.jit(store)(batch, rel_vec, hash_w, mem)
    jax.block_until_ready((batch_bin, hashed, mem_out))

    # light sanity checks
    assert hashed.shape == (n_edges, MEM_CHAN)
    assert int(hashed.min()) >= 0 and int(hashed.max()) <= MEM_WIDTH - 1
    assert set(np.unique(np.asarray(batch_bin))).issubset({0.0, 1.0})
    # total increments added to mem must equal n_edges * prod(trailing dims)
    assert int(mem_out.sum()) == n_edges * int(np.prod(MEM_SIZE[MEM_CHAN:]))

    print("KERNEL_OK")
</pallas_src>

<mosaic_0001>
module attributes {stable_mosaic.version = 11 : i64} {
  func.func @_hash_kernel(%arg0: i32, %arg1: memref<816x241xf32, #tpu.memory_space<vmem>>, %arg2: memref<241x128xf32, #tpu.memory_space<vmem>>, %arg3: memref<816x128xi32, #tpu.memory_space<vmem>>) attributes {dimension_semantics = [#tpu.dimension_semantics<parallel>], iteration_bounds = array<i64: 2>, scalar_prefetch = 0 : i64, scratch_operands = 0 : i64, tpu.core_type = #tpu.core_type<tc>, window_params = [{transform_indices = @transform_0, window_bounds = array<i64: 816, 241>}, {pipeline_mode = #tpu.pipeline_mode<synchronous>, transform_indices = @transform_1, window_bounds = array<i64: 241, 128>}, {transform_indices = @transform_2, window_bounds = array<i64: 816, 128>}]} {
    %c0 = arith.constant 0 : index
    %c0_0 = arith.constant 0 : index
    %0 = vector.load %arg1[%c0, %c0_0] : memref<816x241xf32, #tpu.memory_space<vmem>>, vector<816x241xf32>
    %c0_1 = arith.constant 0 : index
    %c0_2 = arith.constant 0 : index
    %1 = vector.load %arg2[%c0_1, %c0_2] : memref<241x128xf32, #tpu.memory_space<vmem>>, vector<241x128xf32>
    %cst = arith.constant dense<0.000000e+00> : vector<816x128xf32>
    %2 = tpu.matmul %0, %1, %cst {dimension_numbers = #tpu.dot_dimension_numbers<[1], [0], [0], [1], [0, 0, 1, 1], [], []>} : vector<816x241xf32>, vector<241x128xf32>, vector<816x128xf32> -> vector<816x128xf32>
    %3 = arith.fptosi %2 : vector<816x128xf32> to vector<816x128xi32>
    %c0_i32 = arith.constant 0 : i32
    %c19_i32 = arith.constant 19 : i32
    %4 = vector.broadcast %c0_i32 : i32 to vector<816x128xi32>
    %5 = arith.maxsi %4, %3 : vector<816x128xi32>
    %6 = vector.broadcast %c19_i32 : i32 to vector<816x128xi32>
    %7 = arith.minsi %6, %5 : vector<816x128xi32>
    %c0_3 = arith.constant 0 : index
    %c0_4 = arith.constant 0 : index
    %8 = vector.load %arg3[%c0_3, %c0_4] : memref<816x128xi32, #tpu.memory_space<vmem>>, vector<816x128xi32>
    tpu.vector_store %arg3[%c0_3, %c0_4], %7 {strides = array<i32>} : memref<816x128xi32, #tpu.memory_space<vmem>>, vector<816x128xi32>,
    return
  }
  func.func @transform_0(%arg0: i32) -> (i32, i32) {
    %c0_i32 = arith.constant 0 : i32
    %c0_i32_0 = arith.constant 0 : i32
    return %arg0, %c0_i32 : i32, i32
  }
  func.func @transform_1(%arg0: i32) -> (i32, i32) {
    %c0_i32 = arith.constant 0 : i32
    %c0_i32_0 = arith.constant 0 : i32
    %c0_i32_1 = arith.constant 0 : i32
    return %c0_i32, %c0_i32_0 : i32, i32
  }
  func.func @transform_2(%arg0: i32) -> (i32, i32) {
    %c0_i32 = arith.constant 0 : i32
    %c0_i32_0 = arith.constant 0 : i32
    return %arg0, %c0_i32 : i32, i32
  }
}

</mosaic_0001>

<llo_original>
// kernel: store.1
$region0: #{store.1}
  #allocation0 [shape = 'u32[]', space=smem, size = 0x4, offset = 0x4, fixed_abs, tag = 'smem constant byte address 0x4 - core index']
  #allocation1 [shape = 'u32[144,128]{1,0:T(1,128)}', space=vmem, size = 0x12000, scoped, tag = 'internal scratch']
  %s0 = inlined_call_operand.vmem [shape: f32[1632,241], index: 0, kind: input, shape index: {}]
  %s1 = inlined_call_operand.vmem [shape: f32[241,128], index: 1, kind: input, shape index: {}]
  %s2 = inlined_call_operand.vmem [shape: s32[1632,128], index: 2, kind: output, shape index: {}]
  %s3 = sld [smem:[#allocation0]]
  $region41: #{store.1} parent=0
    _
  %s5 = ssub.s32 1, %s3
  %s6 = scalar_select 0, %s5, %s3
  loop: start=0, step=1, limit=4
  $region2: #{store.1} parent=0 // loop_pre_header
    _
  $region3: #{store.1} parent=0 // loop_header
    %s8 = sphi 0, %s12
    %p9 = scmp.ge.s32.totalorder %s8, 4
    %s18 = sphi 0, %s20
    %s21 = sphi 0, %s18
    %s22 = sphi 0, %s21
    %s38 = sphi 0, %s22
    %s42 = sphi 0, %s42
    %s44 = sphi 0, %s42
    %s45 = sphi 0, %s44
    %s59 = sphi 0, %s45
    %s65 = sphi 0, %s67
    %s68 = sphi 0, %s65
    %s69 = sphi 0, %s68
    %s85 = sphi 0, %s69
  $region4: #{store.1} parent=0 // loop_header_branch
    %11 = sbr.rel (%p9) target = $region8
  $region5: #{store.1} parent=0 // loop_body
    %s13 = ssub.s32 %s8, 1
    %s14 = ssub.s32 %s8, 2
    %s15 = sadd.s32 %s8, 1
    %s16 = ssub.s32 %s8, %s15
    %p17 = scmp.eq.s32.totalorder %s16, 0
    %s19 = sadd.s32 %s18, 1
    %s20 = scalar_select %p17, %s18, %s19
    %p23 = pneg %p17
    %p24 = scmp.eq.s32.totalorder %s8, 1
    %p25 = por %p23, %p24
    %p26 = scmp.ne.s32.totalorder %s18, %s21
    %p27 = scmp.eq.s32.totalorder %s8, 0
    %p28 = por %p26, %p27
    %p29 = scmp.ne.s32.totalorder %s18, %s21
    %p30 = scmp.eq.s32.totalorder %s13, 1
    %p31 = por %p29, %p30
    %p32 = scmp.ne.s32.totalorder %s21, %s22
    %p33 = scmp.eq.s32.totalorder %s13, 0
    %p34 = por %p32, %p33
    %p35 = scmp.ne.s32.totalorder %s21, %s22
    %p36 = scmp.eq.s32.totalorder %s14, 1
    %p37 = por %p35, %p36
    %p39 = scmp.ne.s32.totalorder %s22, %s38
    %p40 = scmp.eq.s32.totalorder %s14, 0
    %p41 = por %p39, %p40
    %s43 = sadd.s32 %s42, 1
    %p46 = scmp.eq.s32.totalorder %s8, 1
    %p47 = scmp.ne.s32.totalorder %s42, %s44
    %p48 = scmp.eq.s32.totalorder %s8, 0
    %p49 = por %p47, %p48
    %p50 = scmp.ne.s32.totalorder %s42, %s44
    %p51 = scmp.eq.s32.totalorder %s13, 1
    %p52 = por %p50, %p51
    %p53 = scmp.ne.s32.totalorder %s44, %s45
    %p54 = scmp.eq.s32.totalorder %s13, 0
    %p55 = por %p53, %p54
    %p56 = scmp.ne.s32.totalorder %s44, %s45
    %p57 = scmp.eq.s32.totalorder %s14, 1
    %p58 = por %p56, %p57
    %p60 = scmp.ne.s32.totalorder %s45, %s59
    %p61 = scmp.eq.s32.totalorder %s14, 0
    %p62 = por %p60, %p61
    %s63 = ssub.s32 %s8, %s15
    %p64 = scmp.eq.s32.totalorder %s63, 0
    %s66 = sadd.s32 %s65, 1
    %s67 = scalar_select %p64, %s65, %s66
    %p70 = pneg %p64
    %p71 = scmp.eq.s32.totalorder %s8, 1
    %p72 = por %p70, %p71
    %p73 = scmp.ne.s32.totalorder %s65, %s68
    %p74 = scmp.eq.s32.totalorder %s8, 0
    %p75 = por %p73, %p74
    %p76 = scmp.ne.s32.totalorder %s65, %s68
    %p77 = scmp.eq.s32.totalorder %s13, 1
    %p78 = por %p76, %p77
    %p79 = scmp.ne.s32.totalorder %s68, %s69
    %p80 = scmp.eq.s32.totalorder %s13, 0
    %p81 = por %p79, %p80
    %p82 = scmp.ne.s32.totalorder %s68, %s69
    %p83 = scmp.eq.s32.totalorder %s14, 1
    %p84 = por %p82, %p83
    %p86 = scmp.ne.s32.totalorder %s69, %s85
    %p87 = scmp.eq.s32.totalorder %s14, 0
    %p88 = por %p86, %p87
    %p89 = scmp.le.s32.totalorder 1, %s8
    %p90 = scmp.lt.s32.totalorder %s8, 3
    %p91 = pnand %p89, %p90
    %p92 = pneg %p91
    // Predicated region
    $region9: #{store.1} parent=5 // pred_check
      _
    $region10: #{store.1} parent=5 // pred_check_branch
      %94 = sbr.rel (%p91) target = $region12
    $region11: #{store.1} parent=5 // pred_region
      %s95 = ssub.s32 %s8, 1
      // Predicated region
      $region13: #{store.1} parent=11 // pred_check
        %p96 = pneg %p55
      $region14: #{store.1} parent=11 // pred_check_branch
        %98 = sbr.rel (%p96) target = $region16
      $region15: #{store.1} parent=11 // pred_region
        _
      $region16: #{store.1} parent=11 // pred_fallthru
        _
    $region12: #{store.1} parent=5 // pred_fallthru
      _
    %p99 = scmp.lt.s32.totalorder %s8, 2
    // Predicated region
    $region17: #{store.1} parent=5 // pred_check
      %p100 = pneg %p99
    $region18: #{store.1} parent=5 // pred_check_branch
      %102 = sbr.rel (%p100) target = $region20
    $region19: #{store.1} parent=5 // pred_region
      // Predicated region
      $region21: #{store.1} parent=19 // pred_check
        %p103 = pneg %p28
      $region22: #{store.1} parent=19 // pred_check_branch
        %105 = sbr.rel (%p103) target = $region24
      $region23: #{store.1} parent=19 // pred_region
        %s106 = smul.u32 102, %s8
        %p107 = scmp.lt.s32.totalorder %s106, 203
        %s108 = scalar_select %p107, %s106, 203
        %s109 = smul.addr %s108, 2
        %s110 = smul.addr %s109, 8
        %s111 = scalar_lea.vmem %s0, %s110
        %s112 = smul.u32 102, %s8
      $region24: #{store.1} parent=19 // pred_fallthru
        _
    $region20: #{store.1} parent=5 // pred_fallthru
      _
    %p113 = scmp.le.s32.totalorder 1, %s8
    %p114 = scmp.lt.s32.totalorder %s8, 3
    %p115 = pnand %p113, %p114
    %p116 = pneg %p115
    // Predicated region
    $region25: #{store.1} parent=5 // pred_check
      _
    $region26: #{store.1} parent=5 // pred_check_branch
      %118 = sbr.rel (%p115) target = $region28
    $region27: #{store.1} parent=5 // pred_region
      %s119 = ssub.s32 %s8, 1
      %s120 = smul.u32 102, %s13
      %p121 = scmp.lt.s32.totalorder %s120, 203
      %s122 = scalar_select %p121, %s120, 203
      %s123 = smul.addr %s122, 2
      %s124 = smul.addr %s123, 8
      %s125 = scalar_lea.vmem %s0, %s124
      %p126 = pneg %p34
      %p127 = pneg %p31
      %p128 = pneg %p55
      %p129 = pneg %p52
      %p130 = pneg %p81
      %p131 = pneg %p78
      %s132 = smul.u32 102, %s13
      %p133 = scmp.lt.s32.totalorder %s132, 203
      %s134 = scalar_select %p133, %s132, 203
      %s135 = smul.addr %s134, 8
      %s136 = scalar_lea.vmem %s2, %s135
      %s137 = smul.u32 102, %s13
      %p138 = scmp.lt.s32.totalorder %s137, 203
      %s139 = scalar_select %p138, %s137, 203
      %s140 = smul.addr %s139, 2
      %s141 = smul.addr %s140, 8
      %s142 = scalar_lea.vmem %s0, %s141
      %s143 = smul.u32 102, %s13
      %s144 = smul.u32 102, %s13
      %p145 = scmp.lt.s32.totalorder %s144, 203
      %s146 = scalar_select %p145, %s144, 203
      %s147 = smul.addr %s146, 8
      %s148 = scalar_lea.vmem %s2, %s147
      %s149 = smul.u32 102, %s13
      %v150 = vld [vmem:[%s142] sm:$0xff]
      %v151 = vld [vmem:[%s142 + $0x8] sm:$0xff]
      %v152 = vld [vmem:[%s142 + $0x10] sm:$0xff]
      %v153 = vld [vmem:[%s142 + $0x18] sm:$0xff]
      %v154 = vld [vmem:[%s142 + $0x20] sm:$0xff]
      %v155 = vld [vmem:[%s142 + $0x28] sm:$0xff]
      %v156 = vld [vmem:[%s142 + $0x30] sm:$0xff]
      %v157 = vld [vmem:[%s142 + $0x38] sm:$0xff]
      %v158 = vld [vmem:[%s142 + $0x40] sm:$0xff]
      %v159 = vld [vmem:[%s142 + $0x48] sm:$0xff]
      %v160 = vld [vmem:[%s142 + $0x50] sm:$0xff]
      %v161 = vld [vmem:[%s142 + $0x58] sm:$0xff]
      %v162 = vld [vmem:[%s142 + $0x60] sm:$0xff]
      %v163 = vld [vmem:[%s142 + $0x68] sm:$0xff]
      %v164 = vld [vmem:[%s142 + $0x70] sm:$0xff]
      %v165 = vld [vmem:[%s142 + $0x78] sm:$0xff]
      %v166 = vld [vmem:[%s142 + $0x80] sm:$0xff]
      %v167 = vld [vmem:[%s142 + $0x88] sm:$0xff]
      %v168 = vld [vmem:[%s142 + $0x90] sm:$0xff]
      %v169 = vld [vmem:[%s142 + $0x98] sm:$0xff]
      %v170 = vld [vmem:[%s142 + $0xa0] sm:$0xff]
      %v171 = vld [vmem:[%s142 + $0xa8] sm:$0xff]
      %v172 = vld [vmem:[%s142 + $0xb0] sm:$0xff]
      %v173 = vld [vmem:[%s142 + $0xb8] sm:$0xff]
      %v174 = vld [vmem:[%s142 + $0xc0] sm:$0xff]
      %v175 = vld [vmem:[%s142 + $0xc8] sm:$0xff]
      %v176 = vld [vmem:[%s142 + $0xd0] sm:$0xff]
      %v177 = vld [vmem:[%s142 + $0xd8] sm:$0xff]
      %v178 = vld [vmem:[%s142 + $0xe0] sm:$0xff]
      %v179 = vld [vmem:[%s142 + $0xe8] sm:$0xff]
      %v180 = vld [vmem:[%s142 + $0xf0] sm:$0xff]
      %v181 = vld [vmem:[%s142 + $0xf8] sm:$0xff]
      %v182 = vld [vmem:[%s142 + $0x100] sm:$0xff]
      %v183 = vld [vmem:[%s142 + $0x108] sm:$0xff]
      %v184 = vld [vmem:[%s142 + $0x110] sm:$0xff]
      %v185 = vld [vmem:[%s142 + $0x118] sm:$0xff]
      %v186 = vld [vmem:[%s142 + $0x120] sm:$0xff]
      %v187 = vld [vmem:[%s142 + $0x128] sm:$0xff]
      %v188 = vld [vmem:[%s142 + $0x130] sm:$0xff]
      %v189 = vld [vmem:[%s142 + $0x138] sm:$0xff]
      %v190 = vld [vmem:[%s142 + $0x140] sm:$0xff]
      %v191 = vld [vmem:[%s142 + $0x148] sm:$0xff]
      %v192 = vld [vmem:[%s142 + $0x150] sm:$0xff]
      %v193 = vld [vmem:[%s142 + $0x158] sm:$0xff]
      %v194 = vld [vmem:[%s142 + $0x160] sm:$0xff]
      %v195 = vld [vmem:[%s142 + $0x168] sm:$0xff]
      %v196 = vld [vmem:[%s142 + $0x170] sm:$0xff]
      %v197 = vld [vmem:[%s142 + $0x178] sm:$0xff]
      %v198 = vld [vmem:[%s142 + $0x180] sm:$0xff]
      %v199 = vld [vmem:[%s142 + $0x188] sm:$0xff]
      %v200 = vld [vmem:[%s142 + $0x190] sm:$0xff]
      %v201 = vld [vmem:[%s142 + $0x198] sm:$0xff]
      %v202 = vld [vmem:[%s142 + $0x1a0] sm:$0xff]
      %v203 = vld [vmem:[%s142 + $0x1a8] sm:$0xff]
      %v204 = vld [vmem:[%s142 + $0x1b0] sm:$0xff]
      %v205 = vld [vmem:[%s142 + $0x1b8] sm:$0xff]
      %v206 = vld [vmem:[%s142 + $0x1c0] sm:$0xff]
      %v207 = vld [vmem:[%s142 + $0x1c8] sm:$0xff]
      %v208 = vld [vmem:[%s142 + $0x1d0] sm:$0xff]
      %v209 = vld [vmem:[%s142 + $0x1d8] sm:$0xff]
      %v210 = vld [vmem:[%s142 + $0x1e0] sm:$0xff]
      %v211 = vld [vmem:[%s142 + $0x1e8] sm:$0xff]
      %v212 = vld [vmem:[%s142 + $0x1f0] sm:$0xff]
      %v213 = vld [vmem:[%s142 + $0x1f8] sm:$0xff]
      %v214 = vld [vmem:[%s142 + $0x200] sm:$0xff]
      %v215 = vld [vmem:[%s142 + $0x208] sm:$0xff]
      %v216 = vld [vmem:[%s142 + $0x210] sm:$0xff]
      %v217 = vld [vmem:[%s142 + $0x218] sm:$0xff]
      %v218 = vld [vmem:[%s142 + $0x220] sm:$0xff]
      %v219 = vld [vmem:[%s142 + $0x228] sm:$0xff]
      %v220 = vld [vmem:[%s142 + $0x230] sm:$0xff]
      %v221 = vld [vmem:[%s142 + $0x238] sm:$0xff]
      %v222 = vld [vmem:[%s142 + $0x240] sm:$0xff]
      %v223 = vld [vmem:[%s142 + $0x248] sm:$0xff]
      %v224 = vld [vmem:[%s142 + $0x250] sm:$0xff]
      %v225 = vld [vmem:[%s142 + $0x258] sm:$0xff]
      %v226 = vld [vmem:[%s142 + $0x260] sm:$0xff]
      %v227 = vld [vmem:[%s142 + $0x268] sm:$0xff]
      %v228 = vld [vmem:[%s142 + $0x270] sm:$0xff]
      %v229 = vld [vmem:[%s142 + $0x278] sm:$0xff]
      %v230 = vld [vmem:[%s142 + $0x280] sm:$0xff]
      %v231 = vld [vmem:[%s142 + $0x288] sm:$0xff]
      %v232 = vld [vmem:[%s142 + $0x290] sm:$0xff]
      %v233 = vld [vmem:[%s142 + $0x298] sm:$0xff]
      %v234 = vld [vmem:[%s142 + $0x2a0] sm:$0xff]
      %v235 = vld [vmem:[%s142 + $0x2a8] sm:$0xff]
      %v236 = vld [vmem:[%s142 + $0x2b0] sm:$0xff]
      %v237 = vld [vmem:[%s142 + $0x2b8] sm:$0xff]
      %v238 = vld [vmem:[%s142 + $0x2c0] sm:$0xff]
      %v239 = vld [vmem:[%s142 + $0x2c8] sm:$0xff]
      %v240 = vld [vmem:[%s142 + $0x2d0] sm:$0xff]
      %v241 = vld [vmem:[%s142 + $0x2d8] sm:$0xff]
      %v242 = vld [vmem:[%s142 + $0x2e0] sm:$0xff]
      %v243 = vld [vmem:[%s142 + $0x2e8] sm:$0xff]
      %v244 = vld [vmem:[%s142 + $0x2f0] sm:$0xff]
      %v245 = vld [vmem:[%s142 + $0x2f8] sm:$0xff]
      %v246 = vld [vmem:[%s142 + $0x300] sm:$0xff]
      %v247 = vld [vmem:[%s142 + $0x308] sm:$0xff]
      %v248 = vld [vmem:[%s142 + $0x310] sm:$0xff]
      %v249 = vld [vmem:[%s142 + $0x318] sm:$0xff]
      %v250 = vld [vmem:[%s142 + $0x320] sm:$0xff]
      %v251 = vld [vmem:[%s142 + $0x328] sm:$0xff]
      %v252 = vld [vmem:[%s142 + $0x330] sm:$0xff]
      %v253 = vld [vmem:[%s142 + $0x338] sm:$0xff]
      %v254 = vld [vmem:[%s142 + $0x340] sm:$0xff]
      %v255 = vld [vmem:[%s142 + $0x348] sm:$0xff]
      %v256 = vld [vmem:[%s142 + $0x350] sm:$0xff]
      %v257 = vld [vmem:[%s142 + $0x358] sm:$0xff]
      %v258 = vld [vmem:[%s142 + $0x360] sm:$0xff]
      %v259 = vld [vmem:[%s142 + $0x368] sm:$0xff]
      %v260 = vld [vmem:[%s142 + $0x370] sm:$0xff]
      %v261 = vld [vmem:[%s142 + $0x378] sm:$0xff]
      %v262 = vld [vmem:[%s142 + $0x380] sm:$0xff]
      %v263 = vld [vmem:[%s142 + $0x388] sm:$0xff]
      %v264 = vld [vmem:[%s142 + $0x390] sm:$0xff]
      %v265 = vld [vmem:[%s142 + $0x398] sm:$0xff]
      %v266 = vld [vmem:[%s142 + $0x3a0] sm:$0xff]
      %v267 = vld [vmem:[%s142 + $0x3a8] sm:$0xff]
      %v268 = vld [vmem:[%s142 + $0x3b0] sm:$0xff]
      %v269 = vld [vmem:[%s142 + $0x3b8] sm:$0xff]
      %v270 = vld [vmem:[%s142 + $0x3c0] sm:$0xff]
      %v271 = vld [vmem:[%s142 + $0x3c8] sm:$0xff]
      %v272 = vld [vmem:[%s142 + $0x3d0] sm:$0xff]
      %v273 = vld [vmem:[%s142 + $0x3d8] sm:$0xff]
      %v274 = vld [vmem:[%s142 + $0x3e0] sm:$0xff]
      %v275 = vld [vmem:[%s142 + $0x3e8] sm:$0xff]
      %v276 = vld [vmem:[%s142 + $0x3f0] sm:$0xff]
      %v277 = vld [vmem:[%s142 + $0x3f8] sm:$0xff]
      %v278 = vld [vmem:[%s142 + $0x400] sm:$0xff]
      %v279 = vld [vmem:[%s142 + $0x408] sm:$0xff]
      %v280 = vld [vmem:[%s142 + $0x410] sm:$0xff]
      %v281 = vld [vmem:[%s142 + $0x418] sm:$0xff]
      %v282 = vld [vmem:[%s142 + $0x420] sm:$0xff]
      %v283 = vld [vmem:[%s142 + $0x428] sm:$0xff]
      %v284 = vld [vmem:[%s142 + $0x430] sm:$0xff]
      %v285 = vld [vmem:[%s142 + $0x438] sm:$0xff]
      %v286 = vld [vmem:[%s142 + $0x440] sm:$0xff]
      %v287 = vld [vmem:[%s142 + $0x448] sm:$0xff]
      %v288 = vld [vmem:[%s142 + $0x450] sm:$0xff]
      %v289 = vld [vmem:[%s142 + $0x458] sm:$0xff]
      %v290 = vld [vmem:[%s142 + $0x460] sm:$0xff]
      %v291 = vld [vmem:[%s142 + $0x468] sm:$0xff]
      %v292 = vld [vmem:[%s142 + $0x470] sm:$0xff]
      %v293 = vld [vmem:[%s142 + $0x478] sm:$0xff]
      %v294 = vld [vmem:[%s142 + $0x480] sm:$0xff]
      %v295 = vld [vmem:[%s142 + $0x488] sm:$0xff]
      %v296 = vld [vmem:[%s142 + $0x490] sm:$0xff]
      %v297 = vld [vmem:[%s142 + $0x498] sm:$0xff]
      %v298 = vld [vmem:[%s142 + $0x4a0] sm:$0xff]
      %v299 = vld [vmem:[%s142 + $0x4a8] sm:$0xff]
      %v300 = vld [vmem:[%s142 + $0x4b0] sm:$0xff]
      %v301 = vld [vmem:[%s142 + $0x4b8] sm:$0xff]
      %v302 = vld [vmem:[%s142 + $0x4c0] sm:$0xff]
      %v303 = vld [vmem:[%s142 + $0x4c8] sm:$0xff]
      %v304 = vld [vmem:[%s142 + $0x4d0] sm:$0xff]
      %v305 = vld [vmem:[%s142 + $0x4d8] sm:$0xff]
      %v306 = vld [vmem:[%s142 + $0x4e0] sm:$0xff]
      %v307 = vld [vmem:[%s142 + $0x4e8] sm:$0xff]
      %v308 = vld [vmem:[%s142 + $0x4f0] sm:$0xff]
      %v309 = vld [vmem:[%s142 + $0x4f8] sm:$0xff]
      %v310 = vld [vmem:[%s142 + $0x500] sm:$0xff]
      %v311 = vld [vmem:[%s142 + $0x508] sm:$0xff]
      %v312 = vld [vmem:[%s142 + $0x510] sm:$0xff]
      %v313 = vld [vmem:[%s142 + $0x518] sm:$0xff]
      %v314 = vld [vmem:[%s142 + $0x520] sm:$0xff]
      %v315 = vld [vmem:[%s142 + $0x528] sm:$0xff]
      %v316 = vld [vmem:[%s142 + $0x530] sm:$0xff]
      %v317 = vld [vmem:[%s142 + $0x538] sm:$0xff]
      %v318 = vld [vmem:[%s142 + $0x540] sm:$0xff]
      %v319 = vld [vmem:[%s142 + $0x548] sm:$0xff]
      %v320 = vld [vmem:[%s142 + $0x550] sm:$0xff]
      %v321 = vld [vmem:[%s142 + $0x558] sm:$0xff]
      %v322 = vld [vmem:[%s142 + $0x560] sm:$0xff]
      %v323 = vld [vmem:[%s142 + $0x568] sm:$0xff]
      %v324 = vld [vmem:[%s142 + $0x570] sm:$0xff]
      %v325 = vld [vmem:[%s142 + $0x578] sm:$0xff]
      %v326 = vld [vmem:[%s142 + $0x580] sm:$0xff]
      %v327 = vld [vmem:[%s142 + $0x588] sm:$0xff]
      %v328 = vld [vmem:[%s142 + $0x590] sm:$0xff]
      %v329 = vld [vmem:[%s142 + $0x598] sm:$0xff]
      %v330 = vld [vmem:[%s142 + $0x5a0] sm:$0xff]
      %v331 = vld [vmem:[%s142 + $0x5a8] sm:$0xff]
      %v332 = vld [vmem:[%s142 + $0x5b0] sm:$0xff]
      %v333 = vld [vmem:[%s142 + $0x5b8] sm:$0xff]
      %v334 = vld [vmem:[%s142 + $0x5c0] sm:$0xff]
      %v335 = vld [vmem:[%s142 + $0x5c8] sm:$0xff]
      %v336 = vld [vmem:[%s142 + $0x5d0] sm:$0xff]
      %v337 = vld [vmem:[%s142 + $0x5d8] sm:$0xff]
      %v338 = vld [vmem:[%s142 + $0x5e0] sm:$0xff]
      %v339 = vld [vmem:[%s142 + $0x5e8] sm:$0xff]
      %v340 = vld [vmem:[%s142 + $0x5f0] sm:$0xff]
      %v341 = vld [vmem:[%s142 + $0x5f8] sm:$0xff]
      %v342 = vld [vmem:[%s142 + $0x600] sm:$0xff]
      %v343 = vld [vmem:[%s142 + $0x608] sm:$0xff]
      %v344 = vld [vmem:[%s142 + $0x610] sm:$0xff]
      %v345 = vld [vmem:[%s142 + $0x618] sm:$0xff]
      %v346 = vld [vmem:[%s142 + $0x620] sm:$0xff]
      %v347 = vld [vmem:[%s142 + $0x628] sm:$0xff]
      %v348 = vld [vmem:[%s142 + $0x630] sm:$0xff]
      %v349 = vld [vmem:[%s142 + $0x638] sm:$0xff]
      %v350 = vld [vmem:[%s142 + $0x640] sm:$0xff]
      %v351 = vld [vmem:[%s142 + $0x648] sm:$0xff]
      %v352 = vld [vmem:[%s142 + $0x650] sm:$0xff]
      %v353 = vld [vmem:[%s142 + $0x658] sm:$0xff]
      %v354 = vld [vmem:[%s1] sm:$0xff]
      %v355 = vld [vmem:[%s1 + $0x8] sm:$0xff]
      %v356 = vld [vmem:[%s1 + $0x10] sm:$0xff]
      %v357 = vld [vmem:[%s1 + $0x18] sm:$0xff]
      %v358 = vld [vmem:[%s1 + $0x20] sm:$0xff]
      %v359 = vld [vmem:[%s1 + $0x28] sm:$0xff]
      %v360 = vld [vmem:[%s1 + $0x30] sm:$0xff]
      %v361 = vld [vmem:[%s1 + $0x38] sm:$0xff]
      %v362 = vld [vmem:[%s1 + $0x40] sm:$0xff]
      %v363 = vld [vmem:[%s1 + $0x48] sm:$0xff]
      %v364 = vld [vmem:[%s1 + $0x50] sm:$0xff]
      %v365 = vld [vmem:[%s1 + $0x58] sm:$0xff]
      %v366 = vld [vmem:[%s1 + $0x60] sm:$0xff]
      %v367 = vld [vmem:[%s1 + $0x68] sm:$0xff]
      %v368 = vld [vmem:[%s1 + $0x70] sm:$0xff]
      %v369 = vld [vmem:[%s1 + $0x78] sm:$0xff]
      %v370 = vld [vmem:[%s1 + $0x80] sm:$0xff]
      %v371 = vld [vmem:[%s1 + $0x88] sm:$0xff]
      %v372 = vld [vmem:[%s1 + $0x90] sm:$0xff]
      %v373 = vld [vmem:[%s1 + $0x98] sm:$0xff]
      %v374 = vld [vmem:[%s1 + $0xa0] sm:$0xff]
      %v375 = vld [vmem:[%s1 + $0xa8] sm:$0xff]
      %v376 = vld [vmem:[%s1 + $0xb0] sm:$0xff]
      %v377 = vld [vmem:[%s1 + $0xb8] sm:$0xff]
      %v378 = vld [vmem:[%s1 + $0xc0] sm:$0xff]
      %v379 = vld [vmem:[%s1 + $0xc8] sm:$0xff]
      %v380 = vld [vmem:[%s1 + $0xd0] sm:$0xff]
      %v381 = vld [vmem:[%s1 + $0xd8] sm:$0xff]
      %v382 = vld [vmem:[%s1 + $0xe0] sm:$0xff]
      %v383 = vld [vmem:[%s1 + $0xe8] sm:$0xff]
      %v384 = vld [vmem:[%s1 + $0xf0] sm:$0x1]
      %vm385 = vcmask 924672
      %v387 = vsel %vm385, %v151, 0
      %v390 = vsel %vm385, %v153, 0
      %v393 = vsel %vm385, %v155, 0
      %v396 = vsel %vm385, %v157, 0
      %v399 = vsel %vm385, %v159, 0
      %v402 = vsel %vm385, %v161, 0
      %v405 = vsel %vm385, %v163, 0
      %v408 = vsel %vm385, %v165, 0
      %v411 = vsel %vm385, %v167, 0
      %v414 = vsel %vm385, %v169, 0
      %v417 = vsel %vm385, %v171, 0
      %v420 = vsel %vm385, %v173, 0
      %v423 = vsel %vm385, %v175, 0
      %v426 = vsel %vm385, %v177, 0
      %v429 = vsel %vm385, %v179, 0
      %v432 = vsel %vm385, %v181, 0
      %v435 = vsel %vm385, %v183, 0
      %v438 = vsel %vm385, %v185, 0
      %v441 = vsel %vm385, %v187, 0
      %v444 = vsel %vm385, %v189, 0
      %v447 = vsel %vm385, %v191, 0
      %v450 = vsel %vm385, %v193, 0
      %v453 = vsel %vm385, %v195, 0
      %v456 = vsel %vm385, %v197, 0
      %v459 = vsel %vm385, %v199, 0
      %v462 = vsel %vm385, %v201, 0
      %v465 = vsel %vm385, %v203, 0
      %v468 = vsel %vm385, %v205, 0
      %v471 = vsel %vm385, %v207, 0
      %v474 = vsel %vm385, %v209, 0
      %v477 = vsel %vm385, %v211, 0
      %v480 = vsel %vm385, %v213, 0
      %v483 = vsel %vm385, %v215, 0
      %v486 = vsel %vm385, %v217, 0
      %v489 = vsel %vm385, %v219, 0
      %v492 = vsel %vm385, %v221, 0
      %v495 = vsel %vm385, %v223, 0
      %v498 = vsel %vm385, %v225, 0
      %v501 = vsel %vm385, %v227, 0
      %v504 = vsel %vm385, %v229, 0
      %v507 = vsel %vm385, %v231, 0
      %v510 = vsel %vm385, %v233, 0
      %v513 = vsel %vm385, %v235, 0
      %v516 = vsel %vm385, %v237, 0
      %v519 = vsel %vm385, %v239, 0
      %v522 = vsel %vm385, %v241, 0
      %v525 = vsel %vm385, %v243, 0
      %v528 = vsel %vm385, %v245, 0
      %v531 = vsel %vm385, %v247, 0
      %v534 = vsel %vm385, %v249, 0
      %v537 = vsel %vm385, %v251, 0
      %v540 = vsel %vm385, %v253, 0
      %v543 = vsel %vm385, %v255, 0
      %v546 = vsel %vm385, %v257, 0
      %v549 = vsel %vm385, %v259, 0
      %v552 = vsel %vm385, %v261, 0
      %v555 = vsel %vm385, %v263, 0
      %v558 = vsel %vm385, %v265, 0
      %v561 = vsel %vm385, %v267, 0
      %v564 = vsel %vm385, %v269, 0
      %v567 = vsel %vm385, %v271, 0
      %v570 = vsel %vm385, %v273, 0
      %v573 = vsel %vm385, %v275, 0
      %v576 = vsel %vm385, %v277, 0
      %v579 = vsel %vm385, %v279, 0
      %v582 = vsel %vm385, %v281, 0
      %v585 = vsel %vm385, %v283, 0
      %v588 = vsel %vm385, %v285, 0
      %v591 = vsel %vm385, %v287, 0
      %v594 = vsel %vm385, %v289, 0
      %v597 = vsel %vm385, %v291, 0
      %v600 = vsel %vm385, %v293, 0
      %v603 = vsel %vm385, %v295, 0
      %v606 = vsel %vm385, %v297, 0
      %v609 = vsel %vm385, %v299, 0
      %v612 = vsel %vm385, %v301, 0
      %v615 = vsel %vm385, %v303, 0
      %v618 = vsel %vm385, %v305, 0
      %v621 = vsel %vm385, %v307, 0
      %v624 = vsel %vm385, %v309, 0
      %v627 = vsel %vm385, %v311, 0
      %v630 = vsel %vm385, %v313, 0
      %v633 = vsel %vm385, %v315, 0
      %v636 = vsel %vm385, %v317, 0
      %v639 = vsel %vm385, %v319, 0
      %v642 = vsel %vm385, %v321, 0
      %v645 = vsel %vm385, %v323, 0
      %v648 = vsel %vm385, %v325, 0
      %v651 = vsel %vm385, %v327, 0
      %v654 = vsel %vm385, %v329, 0
      %v657 = vsel %vm385, %v331, 0
      %v660 = vsel %vm385, %v333, 0
      %v663 = vsel %vm385, %v335, 0
      %v666 = vsel %vm385, %v337, 0
      %v669 = vsel %vm385, %v339, 0
      %v672 = vsel %vm385, %v341, 0
      %v675 = vsel %vm385, %v343, 0
      %v678 = vsel %vm385, %v345, 0
      %v681 = vsel %vm385, %v347, 0
      %v684 = vsel %vm385, %v349, 0
      %v687 = vsel %vm385, %v351, 0
      %v690 = vsel %vm385, %v353, 0
      %vm692 = vcmask 1040384
      %v694 = vsel %vm692, %v384, 0
      %696 = vmatprep.subr.mxu0 0.0
      %697 = vmatpush1.msra.mxu0 %v354
      %698 = vmatprep.subr.mxu0 0.0
      %699 = vmatpush1.msra.mxu0 %v355
      %700 = vmatprep.subr.mxu0 0.0
      %701 = vmatpush1.msra.mxu0 %v356
      %702 = vmatprep.subr.mxu0 0.0
      %703 = vmatpush1.msra.mxu0 %v357
      %704 = vmatprep.subr.mxu0 0.0
      %705 = vmatpush1.msra.mxu0 %v358
      %706 = vmatprep.subr.mxu0 0.0
      %707 = vmatpush1.msra.mxu0 %v359
      %708 = vmatprep.subr.mxu0 0.0
      %709 = vmatpush1.msra.mxu0 %v360
      %710 = vmatprep.subr.mxu0 0.0
      %711 = vmatpush1.msra.mxu0 %v361
      %712 = vmatprep.subr.mxu0 0.0
      %713 = vmatpush1.msra.mxu0 %v362
      %714 = vmatprep.subr.mxu0 0.0
      %715 = vmatpush1.msra.mxu0 %v363
      %716 = vmatprep.subr.mxu0 0.0
      %717 = vmatpush1.msra.mxu0 %v364
      %718 = vmatprep.subr.mxu0 0.0
      %719 = vmatpush1.msra.mxu0 %v365
      %720 = vmatprep.subr.mxu0 0.0
      %721 = vmatpush1.msra.mxu0 %v366
      %722 = vmatprep.subr.mxu0 0.0
      %723 = vmatpush1.msra.mxu0 %v367
      %724 = vmatprep.subr.mxu0 0.0
      %725 = vmatpush1.msra.mxu0 %v368
      %726 = vmatprep.subr.mxu0 0.0
      %727 = vmatpush1.msra.mxu0 %v369
      %728 = vmatprep.subr.mxu0 0.0
      %729 = vmatpush1.msra.mxu0 %v370
      %730 = vmatprep.subr.mxu0 0.0
      %731 = vmatpush1.msra.mxu0 %v371
      %732 = vmatprep.subr.mxu0 0.0
      %733 = vmatpush1.msra.mxu0 %v372
      %734 = vmatprep.subr.mxu0 0.0
      %735 = vmatpush1.msra.mxu0 %v373
      %736 = vmatprep.subr.mxu0 0.0
      %737 = vmatpush1.msra.mxu0 %v374
      %738 = vmatprep.subr.mxu0 0.0
      %739 = vmatpush1.msra.mxu0 %v375
      %740 = vmatprep.subr.mxu0 0.0
      %741 = vmatpush1.msra.mxu0 %v376
      %742 = vmatprep.subr.mxu0 0.0
      %743 = vmatpush1.msra.mxu0 %v377
      %744 = vmatprep.subr.mxu0 0.0
      %745 = vmatpush1.msra.mxu0 %v378
      %746 = vmatprep.subr.mxu0 0.0
      %747 = vmatpush1.msra.mxu0 %v379
      %748 = vmatprep.subr.mxu0 0.0
      %749 = vmatpush1.msra.mxu0 %v380
      %750 = vmatprep.subr.mxu0 0.0
      %751 = vmatpush1.msra.mxu0 %v381
      %752 = vmatprep.subr.mxu0 0.0
      %753 = vmatpush1.msra.mxu0 %v382
      %754 = vmatprep.subr.mxu0 0.0
      %755 = vmatpush1.msra.mxu0 %v383
      %756 = vmatprep.subr.mxu0 0.0
      %757 = vmatpush1.msra.mxu0 %v694
      %758 = vmatprep.subr.mxu0 0.0
      %759 = vmatpush1.msra.mxu0 0.0
      %760 = vmatprep.mubr.f32.mxu0 %v387
      %761 = vmatmul.mubr.f32.gmra.mrb[0].mxu0 %v150
      %v762 = vpop.f32.mrb[0].mxu0
      %v763 = vadd.f32 0.0, %v762
      %v764 = vpop.f32.mrb[0].mxu0
      %765 = vmatprep.mubr.f32.mxu0 %v390
      %766 = vmatmul.mubr.f32.gmra.mrb[0].mxu0 %v152
      %v767 = vpop.f32.mrb[0].mxu0
      %v768 = vadd.f32 0.0, %v767
      %v769 = vpop.f32.mrb[0].mxu0
      %770 = vmatprep.mubr.f32.mxu0 %v393
      %771 = vmatmul.mubr.f32.gmra.mrb[0].mxu0 %v154
      %v772 = vpop.f32.mrb[0].mxu0
      %v773 = vadd.f32 0.0, %v772
      %v774 = vpop.f32.mrb[0].mxu0
      %775 = vmatprep.mubr.f32.mxu0 %v396
      %776 = vmatmul.mubr.f32.gmra.mrb[0].mxu0 %v156
      %v777 = vpop.f32.mrb[0].mxu0
      %v778 = vadd.f32 0.0, %v777
      %v779 = vpop.f32.mrb[0].mxu0
      %780 = vmatprep.mubr.f32.mxu0 %v399
      %781 = vmatmul.mubr.f32.gmra.mrb[0].mxu0 %v158
      %v782 = vpop.f32.mrb[0].mxu0
      %v783 = vadd.f32 0.0, %v782
      %v784 = vpop.f32.mrb[0].mxu0
      %785 = vmatprep.mubr.f32.mxu0 %v402
      %786 = vmatmul.mubr.f32.gmra.mrb[0].mxu0 %v160
      %v787 = vpop.f32.mrb[0].mxu0
      %v788 = vadd.f32 0.0, %v787
      %v789 = vpop.f32.mrb[0].mxu0
      %790 = vmatprep.mubr.f32.mxu0 %v405
      %791 = vmatmul.mubr.f32.gmra.mrb[0].mxu0 %v162
      %v792 = vpop.f32.mrb[0].mxu0
      %v793 = vadd.f32 0.0, %v792
      %v794 = vpop.f32.mrb[0].mxu0
      %795 = vmatprep.mubr.f32.mxu0 %v408
      %796 = vmatmul.mubr.f32.gmra.mrb[0].mxu0 %v164
      %v797 = vpop.f32.mrb[0].mxu0
      %v798 = vadd.f32 0.0, %v797
      %v799 = vpop.f32.mrb[0].mxu0
      %800 = vmatprep.mubr.f32.mxu0 %v411
      %801 = vmatmul.mubr.f32.gmra.mrb[0].mxu0 %v166
      %v802 = vpop.f32.mrb[0].mxu0
      %v803 = vadd.f32 0.0, %v802
      %v804 = vpop.f32.mrb[0].mxu0
      %805 = vmatprep.mubr.f32.mxu0 %v414
      %806 = vmatmul.mubr.f32.gmra.mrb[0].mxu0 %v168
      %v807 = vpop.f32.mrb[0].mxu0
      %v808 = vadd.f32 0.0, %v807
      %v809 = vpop.f32.mrb[0].mxu0
      %810 = vmatprep.mubr.f32.mxu0 %v417
      %811 = vmatmul.mubr.f32.gmra.mrb[0].mxu0 %v170
      %v812 = vpop.f32.mrb[0].mxu0
      %v813 = vadd.f32 0.0, %v812
      %v814 = vpop.f32.mrb[0].mxu0
      %815 = vmatprep.mubr.f32.mxu0 %v420
      %816 = vmatmul.mubr.f32.gmra.mrb[0].mxu0 %v172
      %v817 = vpop.f32.mrb[0].mxu0
      %v818 = vadd.f32 0.0, %v817
      %v819 = vpop.f32.mrb[0].mxu0
      %820 = vmatprep.mubr.f32.mxu0 %v423
      %821 = vmatmul.mubr.f32.gmra.mrb[0].mxu0 %v174
      %v822 = vpop.f32.mrb[0].mxu0
      %v823 = vadd.f32 0.0, %v822
      %v824 = vpop.f32.mrb[0].mxu0
      %825 = vmatprep.mubr.f32.mxu0 %v426
      %826 = vmatmul.mubr.f32.gmra.mrb[0].mxu0 %v176
      %v827 = vpop.f32.mrb[0].mxu0
      %v828 = vadd.f32 0.0, %v827
      %v829 = vpop.f32.mrb[0].mxu0
      %830 = vmatprep.mubr.f32.mxu0 %v429
      %831 = vmatmul.mubr.f32.gmra.mrb[0].mxu0 %v178
      %v832 = vpop.f32.mrb[0].mxu0
      %v833 = vadd.f32 0.0, %v832
      %v834 = vpop.f32.mrb[0].mxu0
      %835 = vmatprep.mubr.f32.mxu0 %v432
      %836 = vmatmul.mubr.f32.gmra.mrb[0].mxu0 %v180
      %v837 = vpop.f32.mrb[0].mxu0
      %v838 = vadd.f32 0.0, %v837
      %v839 = vpop.f32.mrb[0].mxu0
      %840 = vmatprep.mubr.f32.mxu0 %v435
      %841 = vmatmul.mubr.f32.gmra.mrb[0].mxu0 %v182
      %v842 = vpop.f32.mrb[0].mxu0
      %v843 = vadd.f32 0.0, %v842
      %v844 = vpop.f32.mrb[0].mxu0
      %845 = vmatprep.mubr.f32.mxu0 %v438
      %846 = vmatmul.mubr.f32.gmra.mrb[0].mxu0 %v184
      %v847 = vpop.f32.mrb[0].mxu0
      %v848 = vadd.f32 0.0, %v847
      %v849 = vpop.f32.mrb[0].mxu0
      %850 = vmatprep.mubr.f32.mxu0 %v441
      %851 = vmatmul.mubr.f32.gmra.mrb[0].mxu0 %v186
      %v852 = vpop.f32.mrb[0].mxu0
      %v853 = vadd.f32 0.0, %v852
      %v854 = vpop.f32.mrb[0].mxu0
      %855 = vmatprep.mubr.f32.mxu0 %v444
      %856 = vmatmul.mubr.f32.gmra.mrb[0].mxu0 %v188
      %v857 = vpop.f32.mrb[0].mxu0
      %v858 = vadd.f32 0.0, %v857
      %v859 = vpop.f32.mrb[0].mxu0
      %860 = vmatprep.mubr.f32.mxu0 %v447
      %861 = vmatmul.mubr.f32.gmra.mrb[0].mxu0 %v190
      %v862 = vpop.f32.mrb[0].mxu0
      %v863 = vadd.f32 0.0, %v862
      %v864 = vpop.f32.mrb[0].mxu0
      %865 = vmatprep.mubr.f32.mxu0 %v450
      %866 = vmatmul.mubr.f32.gmra.mrb[0].mxu0 %v192
      %v867 = vpop.f32.mrb[0].mxu0
      %v868 = vadd.f32 0.0, %v867
      %v869 = vpop.f32.mrb[0].mxu0
      %870 = vmatprep.mubr.f32.mxu0 %v453
      %871 = vmatmul.mubr.f32.gmra.mrb[0].mxu0 %v194
      %v872 = vpop.f32.mrb[0].mxu0
      %v873 = vadd.f32 0.0, %v872
      %v874 = vpop.f32.mrb[0].mxu0
      %875 = vmatprep.mubr.f32.mxu0 %v456
      %876 = vmatmul.mubr.f32.gmra.mrb[0].mxu0 %v196
      %v877 = vpop.f32.mrb[0].mxu0
      %v878 = vadd.f32 0.0, %v877
      %v879 = vpop.f32.mrb[0].mxu0
      %880 = vmatprep.mubr.f32.mxu0 %v459
      %881 = vmatmul.mubr.f32.gmra.mrb[0].mxu0 %v198
      %v882 = vpop.f32.mrb[0].mxu0
      %v883 = vadd.f32 0.0, %v882
      %v884 = vpop.f32.mrb[0].mxu0
      %885 = vmatprep.mubr.f32.mxu0 %v462
      %886 = vmatmul.mubr.f32.gmra.mrb[0].mxu0 %v200
      %v887 = vpop.f32.mrb[0].mxu0
      %v888 = vadd.f32 0.0, %v887
      %v889 = vpop.f32.mrb[0].mxu0
      %890 = vmatprep.mubr.f32.mxu0 %v465
      %891 = vmatmul.mubr.f32.gmra.mrb[0].mxu0 %v202
      %v892 = vpop.f32.mrb[0].mxu0
      %v893 = vadd.f32 0.0, %v892
      %v894 = vpop.f32.mrb[0].mxu0
      %895 = vmatprep.mubr.f32.mxu0 %v468
      %896 = vmatmul.mubr.f32.gmra.mrb[0].mxu0 %v204
      %v897 = vpop.f32.mrb[0].mxu0
      %v898 = vadd.f32 0.0, %v897
      %v899 = vpop.f32.mrb[0].mxu0
      %900 = vmatprep.mubr.f32.mxu0 %v471
      %901 = vmatmul.mubr.f32.gmra.mrb[0].mxu0 %v206
      %v902 = vpop.f32.mrb[0].mxu0
      %v903 = vadd.f32 0.0, %v902
      %v904 = vpop.f32.mrb[0].mxu0
      %905 = vmatprep.mubr.f32.mxu0 %v474
      %906 = vmatmul.mubr.f32.gmra.mrb[0].mxu0 %v208
      %v907 = vpop.f32.mrb[0].mxu0
      %v908 = vadd.f32 0.0, %v907
      %v909 = vpop.f32.mrb[0].mxu0
      %910 = vmatprep.mubr.f32.mxu0 %v477
      %911 = vmatmul.mubr.f32.gmra.mrb[0].mxu0 %v210
      %v912 = vpop.f32.mrb[0].mxu0
      %v913 = vadd.f32 0.0, %v912
      %v914 = vpop.f32.mrb[0].mxu0
      %915 = vmatprep.mubr.f32.mxu0 %v480
      %916 = vmatmul.mubr.f32.gmra.mrb[0].mxu0 %v212
      %v917 = vpop.f32.mrb[0].mxu0
      %v918 = vadd.f32 0.0, %v917
      %v919 = vpop.f32.mrb[0].mxu0
      %920 = vmatprep.mubr.f32.mxu0 %v483
      %921 = vmatmul.mubr.f32.gmra.mrb[0].mxu0 %v214
      %v922 = vpop.f32.mrb[0].mxu0
      %v923 = vadd.f32 0.0, %v922
      %v924 = vpop.f32.mrb[0].mxu0
      %925 = vmatprep.mubr.f32.mxu0 %v486
      %926 = vmatmul.mubr.f32.gmra.mrb[0].mxu0 %v216
      %v927 = vpop.f32.mrb[0].mxu0
      %v928 = vadd.f32 0.0, %v927
      %v929 = vpop.f32.mrb[0].mxu0
      %930 = vmatprep.mubr.f32.mxu0 %v489
      %931 = vmatmul.mubr.f32.gmra.mrb[0].mxu0 %v218
      %v932 = vpop.f32.mrb[0].mxu0
      %v933 = vadd.f32 0.0, %v932
      %v934 = vpop.f32.mrb[0].mxu0
      %935 = vmatprep.mubr.f32.mxu0 %v492
      %936 = vmatmul.mubr.f32.gmra.mrb[0].mxu0 %v220
      %v937 = vpop.f32.mrb[0].mxu0
      %v938 = vadd.f32 0.0, %v937
      %v939 = vpop.f32.mrb[0].mxu0
      %940 = vmatprep.mubr.f32.mxu0 %v495
      %941 = vmatmul.mubr.f32.gmra.mrb[0].mxu0 %v222
      %v942 = vpop.f32.mrb[0].mxu0
      %v943 = vadd.f32 0.0, %v942
      %v944 = vpop.f32.mrb[0].mxu0
      %945 = vmatprep.mubr.f32.mxu0 %v498
      %946 = vmatmul.mubr.f32.gmra.mrb[0].mxu0 %v224
      %v947 = vpop.f32.mrb[0].mxu0
      %v948 = vadd.f32 0.0, %v947
      %v949 = vpop.f32.mrb[0].mxu0
      %950 = vmatprep.mubr.f32.mxu0 %v501
      %951 = vmatmul.mubr.f32.gmra.mrb[0].mxu0 %v226
      %v952 = vpop.f32.mrb[0].mxu0
      %v953 = vadd.f32 0.0, %v952
      %v954 = vpop.f32.mrb[0].mxu0
      %955 = vmatprep.mubr.f32.mxu0 %v504
      %956 = vmatmul.mubr.f32.gmra.mrb[0].mxu0 %v228
      %v957 = vpop.f32.mrb[0].mxu0
      %v958 = vadd.f32 0.0, %v957
      %v959 = vpop.f32.mrb[0].mxu0
      %960 = vmatprep.mubr.f32.mxu0 %v507
      %961 = vmatmul.mubr.f32.gmra.mrb[0].mxu0 %v230
      %v962 = vpop.f32.mrb[0].mxu0
      %v963 = vadd.f32 0.0, %v962
      %v964 = vpop.f32.mrb[0].mxu0
      %965 = vmatprep.mubr.f32.mxu0 %v510
      %966 = vmatmul.mubr.f32.gmra.mrb[0].mxu0 %v232
      %v967 = vpop.f32.mrb[0].mxu0
      %v968 = vadd.f32 0.0, %v967
      %v969 = vpop.f32.mrb[0].mxu0
      %970 = vmatprep.mubr.f32.mxu0 %v513
      %971 = vmatmul.mubr.f32.gmra.mrb[0].mxu0 %v234
      %v972 = vpop.f32.mrb[0].mxu0
      %v973 = vadd.f32 0.0, %v972
      %v974 = vpop.f32.mrb[0].mxu0
      %975 = vmatprep.mubr.f32.mxu0 %v516
      %976 = vmatmul.mubr.f32.gmra.mrb[0].mxu0 %v236
      %v977 = vpop.f32.mrb[0].mxu0
      %v978 = vadd.f32 0.0, %v977
      %v979 = vpop.f32.mrb[0].mxu0
      %980 = vmatprep.mubr.f32.mxu0 %v519
      %981 = vmatmul.mubr.f32.gmra.mrb[0].mxu0 %v238
      %v982 = vpop.f32.mrb[0].mxu0
      %v983 = vadd.f32 0.0, %v982
      %v984 = vpop.f32.mrb[0].mxu0
      %985 = vmatprep.mubr.f32.mxu0 %v522
      %986 = vmatmul.mubr.f32.gmra.mrb[0].mxu0 %v240
      %v987 = vpop.f32.mrb[0].mxu0
      %v988 = vadd.f32 0.0, %v987
      %v989 = vpop.f32.mrb[0].mxu0
      %990 = vmatprep.mubr.f32.mxu0 %v525
      %991 = vmatmul.mubr.f32.gmra.mrb[0].mxu0 %v242
      %v992 = vpop.f32.mrb[0].mxu0
      %v993 = vadd.f32 0.0, %v992
      %v994 = vpop.f32.mrb[0].mxu0
      %995 = vmatprep.mubr.f32.mxu0 %v528
      %996 = vmatmul.mubr.f32.gmra.mrb[0].mxu0 %v244
      %v997 = vpop.f32.mrb[0].mxu0
      %v998 = vadd.f32 0.0, %v997
      %v999 = vpop.f32.mrb[0].mxu0
      %1000 = vmatprep.mubr.f32.mxu0 %v531
      %1001 = vmatmul.mubr.f32.gmra.mrb[0].mxu0 %v246
      %v1002 = vpop.f32.mrb[0].mxu0
      %v1003 = vadd.f32 0.0, %v1002
      %v1004 = vpop.f32.mrb[0].mxu0
      %1005 = vmatprep.mubr.f32.mxu0 %v534
      %1006 = vmatmul.mubr.f32.gmra.mrb[0].mxu0 %v248
      %v1007 = vpop.f32.mrb[0].mxu0
      %v1008 = vadd.f32 0.0, %v1007
      %v1009 = vpop.f32.mrb[0].mxu0
      %1010 = vmatprep.mubr.f32.mxu0 %v537
      %1011 = vmatmul.mubr.f32.gmra.mrb[0].mxu0 %v250
      %v1012 = vpop.f32.mrb[0].mxu0
      %v1013 = vadd.f32 0.0, %v1012
      %v1014 = vpop.f32.mrb[0].mxu0
      %1015 = vmatprep.mubr.f32.mxu0 %v540
      %1016 = vmatmul.mubr.f32.gmra.mrb[0].mxu0 %v252
      %v1017 = vpop.f32.mrb[0].mxu0
      %v1018 = vadd.f32 0.0, %v1017
      %v1019 = vpop.f32.mrb[0].mxu0
      %1020 = vmatprep.mubr.f32.mxu0 %v543
      %1021 = vmatmul.mubr.f32.gmra.mrb[0].mxu0 %v254
      %v1022 = vpop.f32.mrb[0].mxu0
      %v1023 = vadd.f32 0.0, %v1022
      %v1024 = vpop.f32.mrb[0].mxu0
      %1025 = vmatprep.mubr.f32.mxu0 %v546
      %1026 = vmatmul.mubr.f32.gmra.mrb[0].mxu0 %v256
      %v1027 = vpop.f32.mrb[0].mxu0
      %v1028 = vadd.f32 0.0, %v1027
      %v1029 = vpop.f32.mrb[0].mxu0
      %1030 = vmatprep.mubr.f32.mxu0 %v549
      %1031 = vmatmul.mubr.f32.gmra.mrb[0].mxu0 %v258
      %v1032 = vpop.f32.mrb[0].mxu0
      %v1033 = vadd.f32 0.0, %v1032
      %v1034 = vpop.f32.mrb[0].mxu0
      %1035 = vmatprep.mubr.f32.mxu0 %v552
      %1036 = vmatmul.mubr.f32.gmra.mrb[0].mxu0 %v260
      %v1037 = vpop.f32.mrb[0].mxu0
      %v1038 = vadd.f32 0.0, %v1037
      %v1039 = vpop.f32.mrb[0].mxu0
      %1040 = vmatprep.mubr.f32.mxu0 %v555
      %1041 = vmatmul.mubr.f32.gmra.mrb[0].mxu0 %v262
      %v1042 = vpop.f32.mrb[0].mxu0
      %v1043 = vadd.f32 0.0, %v1042
      %v1044 = vpop.f32.mrb[0].mxu0
      %1045 = vmatprep.mubr.f32.mxu0 %v558
      %1046 = vmatmul.mubr.f32.gmra.mrb[0].mxu0 %v264
      %v1047 = vpop.f32.mrb[0].mxu0
      %v1048 = vadd.f32 0.0, %v1047
      %v1049 = vpop.f32.mrb[0].mxu0
      %1050 = vmatprep.mubr.f32.mxu0 %v561
      %1051 = vmatmul.mubr.f32.gmra.mrb[0].mxu0 %v266
      %v1052 = vpop.f32.mrb[0].mxu0
      %v1053 = vadd.f32 0.0, %v1052
      %v1054 = vpop.f32.mrb[0].mxu0
      %1055 = vmatprep.mubr.f32.mxu0 %v564
      %1056 = vmatmul.mubr.f32.gmra.mrb[0].mxu0 %v268
      %v1057 = vpop.f32.mrb[0].mxu0
      %v1058 = vadd.f32 0.0, %v1057
      %v1059 = vpop.f32.mrb[0].mxu0
      %1060 = vmatprep.mubr.f32.mxu0 %v567
      %1061 = vmatmul.mubr.f32.gmra.mrb[0].mxu0 %v270
      %v1062 = vpop.f32.mrb[0].mxu0
      %v1063 = vadd.f32 0.0, %v1062
      %v1064 = vpop.f32.mrb[0].mxu0
      %1065 = vmatprep.mubr.f32.mxu0 %v570
      %1066 = vmatmul.mubr.f32.gmra.mrb[0].mxu0 %v272
      %v1067 = vpop.f32.mrb[0].mxu0
      %v1068 = vadd.f32 0.0, %v1067
      %v1069 = vpop.f32.mrb[0].mxu0
      %1070 = vmatprep.mubr.f32.mxu0 %v573
      %1071 = vmatmul.mubr.f32.gmra.mrb[0].mxu0 %v274
      %v1072 = vpop.f32.mrb[0].mxu0
      %v1073 = vadd.f32 0.0, %v1072
      %v1074 = vpop.f32.mrb[0].mxu0
      %1075 = vmatprep.mubr.f32.mxu0 %v576
      %1076 = vmatmul.mubr.f32.gmra.mrb[0].mxu0 %v276
      %v1077 = vpop.f32.mrb[0].mxu0
      %v1078 = vadd.f32 0.0, %v1077
      %v1079 = vpop.f32.mrb[0].mxu0
      %1080 = vmatprep.mubr.f32.mxu0 %v579
      %1081 = vmatmul.mubr.f32.gmra.mrb[0].mxu0 %v278
      %v1082 = vpop.f32.mrb[0].mxu0
      %v1083 = vadd.f32 0.0, %v1082
      %v1084 = vpop.f32.mrb[0].mxu0
      %1085 = vmatprep.mubr.f32.mxu0 %v582
      %1086 = vmatmul.mubr.f32.gmra.mrb[0].mxu0 %v280
      %v1087 = vpop.f32.mrb[0].mxu0
      %v1088 = vadd.f32 0.0, %v1087
      %v1089 = vpop.f32.mrb[0].mxu0
      %1090 = vmatprep.mubr.f32.mxu0 %v585
      %1091 = vmatmul.mubr.f32.gmra.mrb[0].mxu0 %v282
      %v1092 = vpop.f32.mrb[0].mxu0
      %v1093 = vadd.f32 0.0, %v1092
      %v1094 = vpop.f32.mrb[0].mxu0
      %1095 = vmatprep.mubr.f32.mxu0 %v588
      %1096 = vmatmul.mubr.f32.gmra.mrb[0].mxu0 %v284
      %v1097 = vpop.f32.mrb[0].mxu0
      %v1098 = vadd.f32 0.0, %v1097
      %v1099 = vpop.f32.mrb[0].mxu0
      %1100 = vmatprep.mubr.f32.mxu0 %v591
      %1101 = vmatmul.mubr.f32.gmra.mrb[0].mxu0 %v286
      %v1102 = vpop.f32.mrb[0].mxu0
      %v1103 = vadd.f32 0.0, %v1102
      %v1104 = vpop.f32.mrb[0].mxu0
      %1105 = vmatprep.mubr.f32.mxu0 %v594
      %1106 = vmatmul.mubr.f32.gmra.mrb[0].mxu0 %v288
      %v1107 = vpop.f32.mrb[0].mxu0
      %v1108 = vadd.f32 0.0, %v1107
      %v1109 = vpop.f32.mrb[0].mxu0
      %1110 = vmatprep.mubr.f32.mxu0 %v597
      %1111 = vmatmul.mubr.f32.gmra.mrb[0].mxu0 %v290
      %v1112 = vpop.f32.mrb[0].mxu0
      %v1113 = vadd.f32 0.0, %v1112
      %v1114 = vpop.f32.mrb[0].mxu0
      %1115 = vmatprep.mubr.f32.mxu0 %v600
      %1116 = vmatmul.mubr.f32.gmra.mrb[0].mxu0 %v292
      %v1117 = vpop.f32.mrb[0].mxu0
      %v1118 = vadd.f32 0.0, %v1117
      %v1119 = vpop.f32.mrb[0].mxu0
      %1120 = vmatprep.mubr.f32.mxu0 %v603
      %1121 = vmatmul.mubr.f32.gmra.mrb[0].mxu0 %v294
      %v1122 = vpop.f32.mrb[0].mxu0
      %v1123 = vadd.f32 0.0, %v1122
      %v1124 = vpop.f32.mrb[0].mxu0
      %1125 = vmatprep.mubr.f32.mxu0 %v606
      %1126 = vmatmul.mubr.f32.gmra.mrb[0].mxu0 %v296
      %v1127 = vpop.f32.mrb[0].mxu0
      %v1128 = vadd.f32 0.0, %v1127
      %v1129 = vpop.f32.mrb[0].mxu0
      %1130 = vmatprep.mubr.f32.mxu0 %v609
      %1131 = vmatmul.mubr.f32.gmra.mrb[0].mxu0 %v298
      %v1132 = vpop.f32.mrb[0].mxu0
      %v1133 = vadd.f32 0.0, %v1132
      %v1134 = vpop.f32.mrb[0].mxu0
      %1135 = vmatprep.mubr.f32.mxu0 %v612
      %1136 = vmatmul.mubr.f32.gmra.mrb[0].mxu0 %v300
      %v1137 = vpop.f32.mrb[0].mxu0
      %v1138 = vadd.f32 0.0, %v1137
      %v1139 = vpop.f32.mrb[0].mxu0
      %1140 = vmatprep.mubr.f32.mxu0 %v615
      %1141 = vmatmul.mubr.f32.gmra.mrb[0].mxu0 %v302
      %v1142 = vpop.f32.mrb[0].mxu0
      %v1143 = vadd.f32 0.0, %v1142
      %v1144 = vpop.f32.mrb[0].mxu0
      %1145 = vmatprep.mubr.f32.mxu0 %v618
      %1146 = vmatmul.mubr.f32.gmra.mrb[0].mxu0 %v304
      %v1147 = vpop.f32.mrb[0].mxu0
      %v1148 = vadd.f32 0.0, %v1147
      %v1149 = vpop.f32.mrb[0].mxu0
      %1150 = vmatprep.mubr.f32.mxu0 %v621
      %1151 = vmatmul.mubr.f32.gmra.mrb[0].mxu0 %v306
      %v1152 = vpop.f32.mrb[0].mxu0
      %v1153 = vadd.f32 0.0, %v1152
      %v1154 = vpop.f32.mrb[0].mxu0
      %1155 = vmatprep.mubr.f32.mxu0 %v624
      %1156 = vmatmul.mubr.f32.gmra.mrb[0].mxu0 %v308
      %v1157 = vpop.f32.mrb[0].mxu0
      %v1158 = vadd.f32 0.0, %v1157
      %v1159 = vpop.f32.mrb[0].mxu0
      %1160 = vmatprep.mubr.f32.mxu0 %v627
      %1161 = vmatmul.mubr.f32.gmra.mrb[0].mxu0 %v310
      %v1162 = vpop.f32.mrb[0].mxu0
      %v1163 = vadd.f32 0.0, %v1162
      %v1164 = vpop.f32.mrb[0].mxu0
      %1165 = vmatprep.mubr.f32.mxu0 %v630
      %1166 = vmatmul.mubr.f32.gmra.mrb[0].mxu0 %v312
      %v1167 = vpop.f32.mrb[0].mxu0
      %v1168 = vadd.f32 0.0, %v1167
      %v1169 = vpop.f32.mrb[0].mxu0
      %1170 = vmatprep.mubr.f32.mxu0 %v633
      %1171 = vmatmul.mubr.f32.gmra.mrb[0].mxu0 %v314
      %v1172 = vpop.f32.mrb[0].mxu0
      %v1173 = vadd.f32 0.0, %v1172
      %v1174 = vpop.f32.mrb[0].mxu0
      %1175 = vmatprep.mubr.f32.mxu0 %v636
      %1176 = vmatmul.mubr.f32.gmra.mrb[0].mxu0 %v316
      %v1177 = vpop.f32.mrb[0].mxu0
      %v1178 = vadd.f32 0.0, %v1177
      %v1179 = vpop.f32.mrb[0].mxu0
      %1180 = vmatprep.mubr.f32.mxu0 %v639
      %1181 = vmatmul.mubr.f32.gmra.mrb[0].mxu0 %v318
      %v1182 = vpop.f32.mrb[0].mxu0
      %v1183 = vadd.f32 0.0, %v1182
      %v1184 = vpop.f32.mrb[0].mxu0
      %1185 = vmatprep.mubr.f32.mxu0 %v642
      %1186 = vmatmul.mubr.f32.gmra.mrb[0].mxu0 %v320
      %v1187 = vpop.f32.mrb[0].mxu0
      %v1188 = vadd.f32 0.0, %v1187
      %v1189 = vpop.f32.mrb[0].mxu0
      %1190 = vmatprep.mubr.f32.mxu0 %v645
      %1191 = vmatmul.mubr.f32.gmra.mrb[0].mxu0 %v322
      %v1192 = vpop.f32.mrb[0].mxu0
      %v1193 = vadd.f32 0.0, %v1192
      %v1194 = vpop.f32.mrb[0].mxu0
      %1195 = vmatprep.mubr.f32.mxu0 %v648
      %1196 = vmatmul.mubr.f32.gmra.mrb[0].mxu0 %v324
      %v1197 = vpop.f32.mrb[0].mxu0
      %v1198 = vadd.f32 0.0, %v1197
      %v1199 = vpop.f32.mrb[0].mxu0
      %1200 = vmatprep.mubr.f32.mxu0 %v651
      %1201 = vmatmul.mubr.f32.gmra.mrb[0].mxu0 %v326
      %v1202 = vpop.f32.mrb[0].mxu0
      %v1203 = vadd.f32 0.0, %v1202
      %v1204 = vpop.f32.mrb[0].mxu0
      %1205 = vmatprep.mubr.f32.mxu0 %v654
      %1206 = vmatmul.mubr.f32.gmra.mrb[0].mxu0 %v328
      %v1207 = vpop.f32.mrb[0].mxu0
      %v1208 = vadd.f32 0.0, %v1207
      %v1209 = vpop.f32.mrb[0].mxu0
      %1210 = vmatprep.mubr.f32.mxu0 %v657
      %1211 = vmatmul.mubr.f32.gmra.mrb[0].mxu0 %v330
      %v1212 = vpop.f32.mrb[0].mxu0
      %v1213 = vadd.f32 0.0, %v1212
      %v1214 = vpop.f32.mrb[0].mxu0
      %1215 = vmatprep.mubr.f32.mxu0 %v660
      %1216 = vmatmul.mubr.f32.gmra.mrb[0].mxu0 %v332
      %v1217 = vpop.f32.mrb[0].mxu0
      %v1218 = vadd.f32 0.0, %v1217
      %v1219 = vpop.f32.mrb[0].mxu0
      %1220 = vmatprep.mubr.f32.mxu0 %v663
      %1221 = vmatmul.mubr.f32.gmra.mrb[0].mxu0 %v334
      %v1222 = vpop.f32.mrb[0].mxu0
      %v1223 = vadd.f32 0.0, %v1222
      %v1224 = vpop.f32.mrb[0].mxu0
      %1225 = vmatprep.mubr.f32.mxu0 %v666
      %1226 = vmatmul.mubr.f32.gmra.mrb[0].mxu0 %v336
      %v1227 = vpop.f32.mrb[0].mxu0
      %v1228 = vadd.f32 0.0, %v1227
      %v1229 = vpop.f32.mrb[0].mxu0
      %1230 = vmatprep.mubr.f32.mxu0 %v669
      %1231 = vmatmul.mubr.f32.gmra.mrb[0].mxu0 %v338
      %v1232 = vpop.f32.mrb[0].mxu0
      %v1233 = vadd.f32 0.0, %v1232
      %v1234 = vpop.f32.mrb[0].mxu0
      %1235 = vmatprep.mubr.f32.mxu0 %v672
      %1236 = vmatmul.mubr.f32.gmra.mrb[0].mxu0 %v340
      %v1237 = vpop.f32.mrb[0].mxu0
      %v1238 = vadd.f32 0.0, %v1237
      %v1239 = vpop.f32.mrb[0].mxu0
      %1240 = vmatprep.mubr.f32.mxu0 %v675
      %1241 = vmatmul.mubr.f32.gmra.mrb[0].mxu0 %v342
      %v1242 = vpop.f32.mrb[0].mxu0
      %v1243 = vadd.f32 0.0, %v1242
      %v1244 = vpop.f32.mrb[0].mxu0
      %1245 = vmatprep.mubr.f32.mxu0 %v678
      %1246 = vmatmul.mubr.f32.gmra.mrb[0].mxu0 %v344
      %v1247 = vpop.f32.mrb[0].mxu0
      %v1248 = vadd.f32 0.0, %v1247
      %v1249 = vpop.f32.mrb[0].mxu0
      %1250 = vmatprep.mubr.f32.mxu0 %v681
      %1251 = vmatmul.mubr.f32.gmra.mrb[0].mxu0 %v346
      %v1252 = vpop.f32.mrb[0].mxu0
      %v1253 = vadd.f32 0.0, %v1252
      %v1254 = vpop.f32.mrb[0].mxu0
      %1255 = vmatprep.mubr.f32.mxu0 %v684
      %1256 = vmatmul.mubr.f32.gmra.mrb[0].mxu0 %v348
      %v1257 = vpop.f32.mrb[0].mxu0
      %v1258 = vadd.f32 0.0, %v1257
      %v1259 = vpop.f32.mrb[0].mxu0
      %1260 = vmatprep.mubr.f32.mxu0 %v687
      %1261 = vmatmul.mubr.f32.gmra.mrb[0].mxu0 %v350
      %v1262 = vpop.f32.mrb[0].mxu0
      %v1263 = vadd.f32 0.0, %v1262
      %v1264 = vpop.f32.mrb[0].mxu0
      %1265 = vmatprep.mubr.f32.mxu0 %v690
      %1266 = vmatmul.mubr.f32.gmra.mrb[0].mxu0 %v352
      %v1267 = vpop.f32.mrb[0].mxu0
      %v1268 = vadd.f32 0.0, %v1267
      %v1269 = vpop.f32.mrb[0].mxu0
      %1270 = vdwg.mxu0
      %v1271 = vcvt.f32.s32.to.zero.pseudo %v763
      %v1272 = vcvt.f32.s32.to.zero.pseudo %v768
      %v1273 = vcvt.f32.s32.to.zero.pseudo %v773
      %v1274 = vcvt.f32.s32.to.zero.pseudo %v778
      %v1275 = vcvt.f32.s32.to.zero.pseudo %v783
      %v1276 = vcvt.f32.s32.to.zero.pseudo %v788
      %v1277 = vcvt.f32.s32.to.zero.pseudo %v793
      %v1278 = vcvt.f32.s32.to.zero.pseudo %v798
      %v1279 = vcvt.f32.s32.to.zero.pseudo %v803
      %v1280 = vcvt.f32.s32.to.zero.pseudo %v808
      %v1281 = vcvt.f32.s32.to.zero.pseudo %v813
      %v1282 = vcvt.f32.s32.to.zero.pseudo %v818
      %v1283 = vcvt.f32.s32.to.zero.pseudo %v823
      %v1284 = vcvt.f32.s32.to.zero.pseudo %v828
      %v1285 = vcvt.f32.s32.to.zero.pseudo %v833
      %v1286 = vcvt.f32.s32.to.zero.pseudo %v838
      %v1287 = vcvt.f32.s32.to.zero.pseudo %v843
      %v1288 = vcvt.f32.s32.to.zero.pseudo %v848
      %v1289 = vcvt.f32.s32.to.zero.pseudo %v853
      %v1290 = vcvt.f32.s32.to.zero.pseudo %v858
      %v1291 = vcvt.f32.s32.to.zero.pseudo %v863
      %v1292 = vcvt.f32.s32.to.zero.pseudo %v868
      %v1293 = vcvt.f32.s32.to.zero.pseudo %v873
      %v1294 = vcvt.f32.s32.to.zero.pseudo %v878
      %v1295 = vcvt.f32.s32.to.zero.pseudo %v883
      %v1296 = vcvt.f32.s32.to.zero.pseudo %v888
      %v1297 = vcvt.f32.s32.to.zero.pseudo %v893
      %v1298 = vcvt.f32.s32.to.zero.pseudo %v898
      %v1299 = vcvt.f32.s32.to.zero.pseudo %v903
      %v1300 = vcvt.f32.s32.to.zero.pseudo %v908
      %v1301 = vcvt.f32.s32.to.zero.pseudo %v913
      %v1302 = vcvt.f32.s32.to.zero.pseudo %v918
      %v1303 = vcvt.f32.s32.to.zero.pseudo %v923
      %v1304 = vcvt.f32.s32.to.zero.pseudo %v928
      %v1305 = vcvt.f32.s32.to.zero.pseudo %v933
      %v1306 = vcvt.f32.s32.to.zero.pseudo %v938
      %v1307 = vcvt.f32.s32.to.zero.pseudo %v943
      %v1308 = vcvt.f32.s32.to.zero.pseudo %v948
      %v1309 = vcvt.f32.s32.to.zero.pseudo %v953
      %v1310 = vcvt.f32.s32.to.zero.pseudo %v958
      %v1311 = vcvt.f32.s32.to.zero.pseudo %v963
      %v1312 = vcvt.f32.s32.to.zero.pseudo %v968
      %v1313 = vcvt.f32.s32.to.zero.pseudo %v973
      %v1314 = vcvt.f32.s32.to.zero.pseudo %v978
      %v1315 = vcvt.f32.s32.to.zero.pseudo %v983
      %v1316 = vcvt.f32.s32.to.zero.pseudo %v988
      %v1317 = vcvt.f32.s32.to.zero.pseudo %v993
      %v1318 = vcvt.f32.s32.to.zero.pseudo %v998
      %v1319 = vcvt.f32.s32.to.zero.pseudo %v1003
      %v1320 = vcvt.f32.s32.to.zero.pseudo %v1008
      %v1321 = vcvt.f32.s32.to.zero.pseudo %v1013
      %v1322 = vcvt.f32.s32.to.zero.pseudo %v1018
      %v1323 = vcvt.f32.s32.to.zero.pseudo %v1023
      %v1324 = vcvt.f32.s32.to.zero.pseudo %v1028
      %v1325 = vcvt.f32.s32.to.zero.pseudo %v1033
      %v1326 = vcvt.f32.s32.to.zero.pseudo %v1038
      %v1327 = vcvt.f32.s32.to.zero.pseudo %v1043
      %v1328 = vcvt.f32.s32.to.zero.pseudo %v1048
      %v1329 = vcvt.f32.s32.to.zero.pseudo %v1053
      %v1330 = vcvt.f32.s32.to.zero.pseudo %v1058
      %v1331 = vcvt.f32.s32.to.zero.pseudo %v1063
      %v1332 = vcvt.f32.s32.to.zero.pseudo %v1068
      %v1333 = vcvt.f32.s32.to.zero.pseudo %v1073
      %v1334 = vcvt.f32.s32.to.zero.pseudo %v1078
      %v1335 = vcvt.f32.s32.to.zero.pseudo %v1083
      %v1336 = vcvt.f32.s32.to.zero.pseudo %v1088
      %v1337 = vcvt.f32.s32.to.zero.pseudo %v1093
      %v1338 = vcvt.f32.s32.to.zero.pseudo %v1098
      %v1339 = vcvt.f32.s32.to.zero.pseudo %v1103
      %v1340 = vcvt.f32.s32.to.zero.pseudo %v1108
      %v1341 = vcvt.f32.s32.to.zero.pseudo %v1113
      %v1342 = vcvt.f32.s32.to.zero.pseudo %v1118
      %v1343 = vcvt.f32.s32.to.zero.pseudo %v1123
      %v1344 = vcvt.f32.s32.to.zero.pseudo %v1128
      %v1345 = vcvt.f32.s32.to.zero.pseudo %v1133
      %v1346 = vcvt.f32.s32.to.zero.pseudo %v1138
      %v1347 = vcvt.f32.s32.to.zero.pseudo %v1143
      %v1348 = vcvt.f32.s32.to.zero.pseudo %v1148
      %v1349 = vcvt.f32.s32.to.zero.pseudo %v1153
      %v1350 = vcvt.f32.s32.to.zero.pseudo %v1158
      %v1351 = vcvt.f32.s32.to.zero.pseudo %v1163
      %v1352 = vcvt.f32.s32.to.zero.pseudo %v1168
      %v1353 = vcvt.f32.s32.to.zero.pseudo %v1173
      %v1354 = vcvt.f32.s32.to.zero.pseudo %v1178
      %v1355 = vcvt.f32.s32.to.zero.pseudo %v1183
      %v1356 = vcvt.f32.s32.to.zero.pseudo %v1188
      %v1357 = vcvt.f32.s32.to.zero.pseudo %v1193
      %v1358 = vcvt.f32.s32.to.zero.pseudo %v1198
      %v1359 = vcvt.f32.s32.to.zero.pseudo %v1203
      %v1360 = vcvt.f32.s32.to.zero.pseudo %v1208
      %v1361 = vcvt.f32.s32.to.zero.pseudo %v1213
      %v1362 = vcvt.f32.s32.to.zero.pseudo %v1218
      %v1363 = vcvt.f32.s32.to.zero.pseudo %v1223
      %v1364 = vcvt.f32.s32.to.zero.pseudo %v1228
      %v1365 = vcvt.f32.s32.to.zero.pseudo %v1233
      %v1366 = vcvt.f32.s32.to.zero.pseudo %v1238
      %v1367 = vcvt.f32.s32.to.zero.pseudo %v1243
      %v1368 = vcvt.f32.s32.to.zero.pseudo %v1248
      %v1369 = vcvt.f32.s32.to.zero.pseudo %v1253
      %v1370 = vcvt.f32.s32.to.zero.pseudo %v1258
      %v1371 = vcvt.f32.s32.to.zero.pseudo %v1263
      %v1372 = vcvt.f32.s32.to.zero.pseudo %v1268
      %vm1373 = vcmp.gt.s32.totalorder %v1271, 0
      %v1374 = vsel %vm1373, %v1271, 0
      %vm1375 = vcmp.gt.s32.totalorder %v1272, 0
      %v1376 = vsel %vm1375, %v1272, 0
      %vm1377 = vcmp.gt.s32.totalorder %v1273, 0
      %v1378 = vsel %vm1377, %v1273, 0
      %vm1379 = vcmp.gt.s32.totalorder %v1274, 0
      %v1380 = vsel %vm1379, %v1274, 0
      %vm1381 = vcmp.gt.s32.totalorder %v1275, 0
      %v1382 = vsel %vm1381, %v1275, 0
      %vm1383 = vcmp.gt.s32.totalorder %v1276, 0
      %v1384 = vsel %vm1383, %v1276, 0
      %vm1385 = vcmp.gt.s32.totalorder %v1277, 0
      %v1386 = vsel %vm1385, %v1277, 0
      %vm1387 = vcmp.gt.s32.totalorder %v1278, 0
      %v1388 = vsel %vm1387, %v1278, 0
      %vm1389 = vcmp.gt.s32.totalorder %v1279, 0
      %v1390 = vsel %vm1389, %v1279, 0
      %vm1391 = vcmp.gt.s32.totalorder %v1280, 0
      %v1392 = vsel %vm1391, %v1280, 0
      %vm1393 = vcmp.gt.s32.totalorder %v1281, 0
      %v1394 = vsel %vm1393, %v1281, 0
      %vm1395 = vcmp.gt.s32.totalorder %v1282, 0
      %v1396 = vsel %vm1395, %v1282, 0
      %vm1397 = vcmp.gt.s32.totalorder %v1283, 0
      %v1398 = vsel %vm1397, %v1283, 0
      %vm1399 = vcmp.gt.s32.totalorder %v1284, 0
      %v1400 = vsel %vm1399, %v1284, 0
      %vm1401 = vcmp.gt.s32.totalorder %v1285, 0
      %v1402 = vsel %vm1401, %v1285, 0
      %vm1403 = vcmp.gt.s32.totalorder %v1286, 0
      %v1404 = vsel %vm1403, %v1286, 0
      %vm1405 = vcmp.gt.s32.totalorder %v1287, 0
      %v1406 = vsel %vm1405, %v1287, 0
      %vm1407 = vcmp.gt.s32.totalorder %v1288, 0
      %v1408 = vsel %vm1407, %v1288, 0
      %vm1409 = vcmp.gt.s32.totalorder %v1289, 0
      %v1410 = vsel %vm1409, %v1289, 0
      %vm1411 = vcmp.gt.s32.totalorder %v1290, 0
      %v1412 = vsel %vm1411, %v1290, 0
      %vm1413 = vcmp.gt.s32.totalorder %v1291, 0
      %v1414 = vsel %vm1413, %v1291, 0
      %vm1415 = vcmp.gt.s32.totalorder %v1292, 0
      %v1416 = vsel %vm1415, %v1292, 0
      %vm1417 = vcmp.gt.s32.totalorder %v1293, 0
      %v1418 = vsel %vm1417, %v1293, 0
      %vm1419 = vcmp.gt.s32.totalorder %v1294, 0
      %v1420 = vsel %vm1419, %v1294, 0
      %vm1421 = vcmp.gt.s32.totalorder %v1295, 0
      %v1422 = vsel %vm1421, %v1295, 0
      %vm1423 = vcmp.gt.s32.totalorder %v1296, 0
      %v1424 = vsel %vm1423, %v1296, 0
      %vm1425 = vcmp.gt.s32.totalorder %v1297, 0
      %v1426 = vsel %vm1425, %v1297, 0
      %vm1427 = vcmp.gt.s32.totalorder %v1298, 0
      %v1428 = vsel %vm1427, %v1298, 0
      %vm1429 = vcmp.gt.s32.totalorder %v1299, 0
      %v1430 = vsel %vm1429, %v1299, 0
      %vm1431 = vcmp.gt.s32.totalorder %v1300, 0
      %v1432 = vsel %vm1431, %v1300, 0
      %vm1433 = vcmp.gt.s32.totalorder %v1301, 0
      %v1434 = vsel %vm1433, %v1301, 0
      %vm1435 = vcmp.gt.s32.totalorder %v1302, 0
      %v1436 = vsel %vm1435, %v1302, 0
      %vm1437 = vcmp.gt.s32.totalorder %v1303, 0
      %v1438 = vsel %vm1437, %v1303, 0
      %vm1439 = vcmp.gt.s32.totalorder %v1304, 0
      %v1440 = vsel %vm1439, %v1304, 0
      %vm1441 = vcmp.gt.s32.totalorder %v1305, 0
      %v1442 = vsel %vm1441, %v1305, 0
      %vm1443 = vcmp.gt.s32.totalorder %v1306, 0
      %v1444 = vsel %vm1443, %v1306, 0
      %vm1445 = vcmp.gt.s32.totalorder %v1307, 0
      %v1446 = vsel %vm1445, %v1307, 0
      %vm1447 = vcmp.gt.s32.totalorder %v1308, 0
      %v1448 = vsel %vm1447, %v1308, 0
      %vm1449 = vcmp.gt.s32.totalorder %v1309, 0
      %v1450 = vsel %vm1449, %v1309, 0
      %vm1451 = vcmp.gt.s32.totalorder %v1310, 0
      %v1452 = vsel %vm1451, %v1310, 0
      %vm1453 = vcmp.gt.s32.totalorder %v1311, 0
      %v1454 = vsel %vm1453, %v1311, 0
      %vm1455 = vcmp.gt.s32.totalorder %v1312, 0
      %v1456 = vsel %vm1455, %v1312, 0
      %vm1457 = vcmp.gt.s32.totalorder %v1313, 0
      %v1458 = vsel %vm1457, %v1313, 0
      %vm1459 = vcmp.gt.s32.totalorder %v1314, 0
      %v1460 = vsel %vm1459, %v1314, 0
      %vm1461 = vcmp.gt.s32.totalorder %v1315, 0
      %v1462 = vsel %vm1461, %v1315, 0
      %vm1463 = vcmp.gt.s32.totalorder %v1316, 0
      %v1464 = vsel %vm1463, %v1316, 0
      %vm1465 = vcmp.gt.s32.totalorder %v1317, 0
      %v1466 = vsel %vm1465, %v1317, 0
      %vm1467 = vcmp.gt.s32.totalorder %v1318, 0
      %v1468 = vsel %vm1467, %v1318, 0
      %vm1469 = vcmp.gt.s32.totalorder %v1319, 0
      %v1470 = vsel %vm1469, %v1319, 0
      %vm1471 = vcmp.gt.s32.totalorder %v1320, 0
      %v1472 = vsel %vm1471, %v1320, 0
      %vm1473 = vcmp.gt.s32.totalorder %v1321, 0
      %v1474 = vsel %vm1473, %v1321, 0
      %vm1475 = vcmp.gt.s32.totalorder %v1322, 0
      %v1476 = vsel %vm1475, %v1322, 0
      %vm1477 = vcmp.gt.s32.totalorder %v1323, 0
      %v1478 = vsel %vm1477, %v1323, 0
      %vm1479 = vcmp.gt.s32.totalorder %v1324, 0
      %v1480 = vsel %vm1479, %v1324, 0
      %vm1481 = vcmp.gt.s32.totalorder %v1325, 0
      %v1482 = vsel %vm1481, %v1325, 0
      %vm1483 = vcmp.gt.s32.totalorder %v1326, 0
      %v1484 = vsel %vm1483, %v1326, 0
      %vm1485 = vcmp.gt.s32.totalorder %v1327, 0
      %v1486 = vsel %vm1485, %v1327, 0
      %vm1487 = vcmp.gt.s32.totalorder %v1328, 0
      %v1488 = vsel %vm1487, %v1328, 0
      %vm1489 = vcmp.gt.s32.totalorder %v1329, 0
      %v1490 = vsel %vm1489, %v1329, 0
      %vm1491 = vcmp.gt.s32.totalorder %v1330, 0
      %v1492 = vsel %vm1491, %v1330, 0
      %vm1493 = vcmp.gt.s32.totalorder %v1331, 0
      %v1494 = vsel %vm1493, %v1331, 0
      %vm1495 = vcmp.gt.s32.totalorder %v1332, 0
      %v1496 = vsel %vm1495, %v1332, 0
      %vm1497 = vcmp.gt.s32.totalorder %v1333, 0
      %v1498 = vsel %vm1497, %v1333, 0
      %vm1499 = vcmp.gt.s32.totalorder %v1334, 0
      %v1500 = vsel %vm1499, %v1334, 0
      %vm1501 = vcmp.gt.s32.totalorder %v1335, 0
      %v1502 = vsel %vm1501, %v1335, 0
      %vm1503 = vcmp.gt.s32.totalorder %v1336, 0
      %v1504 = vsel %vm1503, %v1336, 0
      %vm1505 = vcmp.gt.s32.totalorder %v1337, 0
      %v1506 = vsel %vm1505, %v1337, 0
      %vm1507 = vcmp.gt.s32.totalorder %v1338, 0
      %v1508 = vsel %vm1507, %v1338, 0
      %vm1509 = vcmp.gt.s32.totalorder %v1339, 0
      %v1510 = vsel %vm1509, %v1339, 0
      %vm1511 = vcmp.gt.s32.totalorder %v1340, 0
      %v1512 = vsel %vm1511, %v1340, 0
      %vm1513 = vcmp.gt.s32.totalorder %v1341, 0
      %v1514 = vsel %vm1513, %v1341, 0
      %vm1515 = vcmp.gt.s32.totalorder %v1342, 0
      %v1516 = vsel %vm1515, %v1342, 0
      %vm1517 = vcmp.gt.s32.totalorder %v1343, 0
      %v1518 = vsel %vm1517, %v1343, 0
      %vm1519 = vcmp.gt.s32.totalorder %v1344, 0
      %v1520 = vsel %vm1519, %v1344, 0
      %vm1521 = vcmp.gt.s32.totalorder %v1345, 0
      %v1522 = vsel %vm1521, %v1345, 0
      %vm1523 = vcmp.gt.s32.totalorder %v1346, 0
      %v1524 = vsel %vm1523, %v1346, 0
      %vm1525 = vcmp.gt.s32.totalorder %v1347, 0
      %v1526 = vsel %vm1525, %v1347, 0
      %vm1527 = vcmp.gt.s32.totalorder %v1348, 0
      %v1528 = vsel %vm1527, %v1348, 0
      %vm1529 = vcmp.gt.s32.totalorder %v1349, 0
      %v1530 = vsel %vm1529, %v1349, 0
      %vm1531 = vcmp.gt.s32.totalorder %v1350, 0
      %v1532 = vsel %vm1531, %v1350, 0
      %vm1533 = vcmp.gt.s32.totalorder %v1351, 0
      %v1534 = vsel %vm1533, %v1351, 0
      %vm1535 = vcmp.gt.s32.totalorder %v1352, 0
      %v1536 = vsel %vm1535, %v1352, 0
      %vm1537 = vcmp.gt.s32.totalorder %v1353, 0
      %v1538 = vsel %vm1537, %v1353, 0
      %vm1539 = vcmp.gt.s32.totalorder %v1354, 0
      %v1540 = vsel %vm1539, %v1354, 0
      %vm1541 = vcmp.gt.s32.totalorder %v1355, 0
      %v1542 = vsel %vm1541, %v1355, 0
      %vm1543 = vcmp.gt.s32.totalorder %v1356, 0
      %v1544 = vsel %vm1543, %v1356, 0
      %vm1545 = vcmp.gt.s32.totalorder %v1357, 0
      %v1546 = vsel %vm1545, %v1357, 0
      %vm1547 = vcmp.gt.s32.totalorder %v1358, 0
      %v1548 = vsel %vm1547, %v1358, 0
      %vm1549 = vcmp.gt.s32.totalorder %v1359, 0
      %v1550 = vsel %vm1549, %v1359, 0
      %vm1551 = vcmp.gt.s32.totalorder %v1360, 0
      %v1552 = vsel %vm1551, %v1360, 0
      %vm1553 = vcmp.gt.s32.totalorder %v1361, 0
      %v1554 = vsel %vm1553, %v1361, 0
      %vm1555 = vcmp.gt.s32.totalorder %v1362, 0
      %v1556 = vsel %vm1555, %v1362, 0
      %vm1557 = vcmp.gt.s32.totalorder %v1363, 0
      %v1558 = vsel %vm1557, %v1363, 0
      %vm1559 = vcmp.gt.s32.totalorder %v1364, 0
      %v1560 = vsel %vm1559, %v1364, 0
      %vm1561 = vcmp.gt.s32.totalorder %v1365, 0
      %v1562 = vsel %vm1561, %v1365, 0
      %vm1563 = vcmp.gt.s32.totalorder %v1366, 0
      %v1564 = vsel %vm1563, %v1366, 0
      %vm1565 = vcmp.gt.s32.totalorder %v1367, 0
      %v1566 = vsel %vm1565, %v1367, 0
      %vm1567 = vcmp.gt.s32.totalorder %v1368, 0
      %v1568 = vsel %vm1567, %v1368, 0
      %vm1569 = vcmp.gt.s32.totalorder %v1369, 0
      %v1570 = vsel %vm1569, %v1369, 0
      %vm1571 = vcmp.gt.s32.totalorder %v1370, 0
      %v1572 = vsel %vm1571, %v1370, 0
      %vm1573 = vcmp.gt.s32.totalorder %v1371, 0
      %v1574 = vsel %vm1573, %v1371, 0
      %vm1575 = vcmp.gt.s32.totalorder %v1372, 0
      %v1576 = vsel %vm1575, %v1372, 0
      %vm1577 = vcmp.lt.s32.totalorder %v1374, 19
      %v1578 = vsel %vm1577, %v1374, 19
      %vm1579 = vcmp.lt.s32.totalorder %v1376, 19
      %v1580 = vsel %vm1579, %v1376, 19
      %vm1581 = vcmp.lt.s32.totalorder %v1378, 19
      %v1582 = vsel %vm1581, %v1378, 19
      %vm1583 = vcmp.lt.s32.totalorder %v1380, 19
      %v1584 = vsel %vm1583, %v1380, 19
      %vm1585 = vcmp.lt.s32.totalorder %v1382, 19
      %v1586 = vsel %vm1585, %v1382, 19
      %vm1587 = vcmp.lt.s32.totalorder %v1384, 19
      %v1588 = vsel %vm1587, %v1384, 19
      %vm1589 = vcmp.lt.s32.totalorder %v1386, 19
      %v1590 = vsel %vm1589, %v1386, 19
      %vm1591 = vcmp.lt.s32.totalorder %v1388, 19
      %v1592 = vsel %vm1591, %v1388, 19
      %vm1593 = vcmp.lt.s32.totalorder %v1390, 19
      %v1594 = vsel %vm1593, %v1390, 19
      %vm1595 = vcmp.lt.s32.totalorder %v1392, 19
      %v1596 = vsel %vm1595, %v1392, 19
      %vm1597 = vcmp.lt.s32.totalorder %v1394, 19
      %v1598 = vsel %vm1597, %v1394, 19
      %vm1599 = vcmp.lt.s32.totalorder %v1396, 19
      %v1600 = vsel %vm1599, %v1396, 19
      %vm1601 = vcmp.lt.s32.totalorder %v1398, 19
      %v1602 = vsel %vm1601, %v1398, 19
      %vm1603 = vcmp.lt.s32.totalorder %v1400, 19
      %v1604 = vsel %vm1603, %v1400, 19
      %vm1605 = vcmp.lt.s32.totalorder %v1402, 19
      %v1606 = vsel %vm1605, %v1402, 19
      %vm1607 = vcmp.lt.s32.totalorder %v1404, 19
      %v1608 = vsel %vm1607, %v1404, 19
      %vm1609 = vcmp.lt.s32.totalorder %v1406, 19
      %v1610 = vsel %vm1609, %v1406, 19
      %vm1611 = vcmp.lt.s32.totalorder %v1408, 19
      %v1612 = vsel %vm1611, %v1408, 19
      %vm1613 = vcmp.lt.s32.totalorder %v1410, 19
      %v1614 = vsel %vm1613, %v1410, 19
      %vm1615 = vcmp.lt.s32.totalorder %v1412, 19
      %v1616 = vsel %vm1615, %v1412, 19
      %vm1617 = vcmp.lt.s32.totalorder %v1414, 19
      %v1618 = vsel %vm1617, %v1414, 19
      %vm1619 = vcmp.lt.s32.totalorder %v1416, 19
      %v1620 = vsel %vm1619, %v1416, 19
      %vm1621 = vcmp.lt.s32.totalorder %v1418, 19
      %v1622 = vsel %vm1621, %v1418, 19
      %vm1623 = vcmp.lt.s32.totalorder %v1420, 19
      %v1624 = vsel %vm1623, %v1420, 19
      %vm1625 = vcmp.lt.s32.totalorder %v1422, 19
      %v1626 = vsel %vm1625, %v1422, 19
      %vm1627 = vcmp.lt.s32.totalorder %v1424, 19
      %v1628 = vsel %vm1627, %v1424, 19
      %vm1629 = vcmp.lt.s32.totalorder %v1426, 19
      %v1630 = vsel %vm1629, %v1426, 19
      %vm1631 = vcmp.lt.s32.totalorder %v1428, 19
      %v1632 = vsel %vm1631, %v1428, 19
      %vm1633 = vcmp.lt.s32.totalorder %v1430, 19
      %v1634 = vsel %vm1633, %v1430, 19
      %vm1635 = vcmp.lt.s32.totalorder %v1432, 19
      %v1636 = vsel %vm1635, %v1432, 19
      %vm1637 = vcmp.lt.s32.totalorder %v1434, 19
      %v1638 = vsel %vm1637, %v1434, 19
      %vm1639 = vcmp.lt.s32.totalorder %v1436, 19
      %v1640 = vsel %vm1639, %v1436, 19
      %vm1641 = vcmp.lt.s32.totalorder %v1438, 19
      %v1642 = vsel %vm1641, %v1438, 19
      %vm1643 = vcmp.lt.s32.totalorder %v1440, 19
      %v1644 = vsel %vm1643, %v1440, 19
      %vm1645 = vcmp.lt.s32.totalorder %v1442, 19
      %v1646 = vsel %vm1645, %v1442, 19
      %vm1647 = vcmp.lt.s32.totalorder %v1444, 19
      %v1648 = vsel %vm1647, %v1444, 19
      %vm1649 = vcmp.lt.s32.totalorder %v1446, 19
      %v1650 = vsel %vm1649, %v1446, 19
      %vm1651 = vcmp.lt.s32.totalorder %v1448, 19
      %v1652 = vsel %vm1651, %v1448, 19
      %vm1653 = vcmp.lt.s32.totalorder %v1450, 19
      %v1654 = vsel %vm1653, %v1450, 19
      %vm1655 = vcmp.lt.s32.totalorder %v1452, 19
      %v1656 = vsel %vm1655, %v1452, 19
      %vm1657 = vcmp.lt.s32.totalorder %v1454, 19
      %v1658 = vsel %vm1657, %v1454, 19
      %vm1659 = vcmp.lt.s32.totalorder %v1456, 19
      %v1660 = vsel %vm1659, %v1456, 19
      %vm1661 = vcmp.lt.s32.totalorder %v1458, 19
      %v1662 = vsel %vm1661, %v1458, 19
      %vm1663 = vcmp.lt.s32.totalorder %v1460, 19
      %v1664 = vsel %vm1663, %v1460, 19
      %vm1665 = vcmp.lt.s32.totalorder %v1462, 19
      %v1666 = vsel %vm1665, %v1462, 19
      %vm1667 = vcmp.lt.s32.totalorder %v1464, 19
      %v1668 = vsel %vm1667, %v1464, 19
      %vm1669 = vcmp.lt.s32.totalorder %v1466, 19
      %v1670 = vsel %vm1669, %v1466, 19
      %vm1671 = vcmp.lt.s32.totalorder %v1468, 19
      %v1672 = vsel %vm1671, %v1468, 19
      %vm1673 = vcmp.lt.s32.totalorder %v1470, 19
      %v1674 = vsel %vm1673, %v1470, 19
      %vm1675 = vcmp.lt.s32.totalorder %v1472, 19
      %v1676 = vsel %vm1675, %v1472, 19
      %vm1677 = vcmp.lt.s32.totalorder %v1474, 19
      %v1678 = vsel %vm1677, %v1474, 19
      %vm1679 = vcmp.lt.s32.totalorder %v1476, 19
      %v1680 = vsel %vm1679, %v1476, 19
      %vm1681 = vcmp.lt.s32.totalorder %v1478, 19
      %v1682 = vsel %vm1681, %v1478, 19
      %vm1683 = vcmp.lt.s32.totalorder %v1480, 19
      %v1684 = vsel %vm1683, %v1480, 19
      %vm1685 = vcmp.lt.s32.totalorder %v1482, 19
      %v1686 = vsel %vm1685, %v1482, 19
      %vm1687 = vcmp.lt.s32.totalorder %v1484, 19
      %v1688 = vsel %vm1687, %v1484, 19
      %vm1689 = vcmp.lt.s32.totalorder %v1486, 19
      %v1690 = vsel %vm1689, %v1486, 19
      %vm1691 = vcmp.lt.s32.totalorder %v1488, 19
      %v1692 = vsel %vm1691, %v1488, 19
      %vm1693 = vcmp.lt.s32.totalorder %v1490, 19
      %v1694 = vsel %vm1693, %v1490, 19
      %vm1695 = vcmp.lt.s32.totalorder %v1492, 19
      %v1696 = vsel %vm1695, %v1492, 19
      %vm1697 = vcmp.lt.s32.totalorder %v1494, 19
      %v1698 = vsel %vm1697, %v1494, 19
      %vm1699 = vcmp.lt.s32.totalorder %v1496, 19
      %v1700 = vsel %vm1699, %v1496, 19
      %vm1701 = vcmp.lt.s32.totalorder %v1498, 19
      %v1702 = vsel %vm1701, %v1498, 19
      %vm1703 = vcmp.lt.s32.totalorder %v1500, 19
      %v1704 = vsel %vm1703, %v1500, 19
      %vm1705 = vcmp.lt.s32.totalorder %v1502, 19
      %v1706 = vsel %vm1705, %v1502, 19
      %vm1707 = vcmp.lt.s32.totalorder %v1504, 19
      %v1708 = vsel %vm1707, %v1504, 19
      %vm1709 = vcmp.lt.s32.totalorder %v1506, 19
      %v1710 = vsel %vm1709, %v1506, 19
      %vm1711 = vcmp.lt.s32.totalorder %v1508, 19
      %v1712 = vsel %vm1711, %v1508, 19
      %vm1713 = vcmp.lt.s32.totalorder %v1510, 19
      %v1714 = vsel %vm1713, %v1510, 19
      %vm1715 = vcmp.lt.s32.totalorder %v1512, 19
      %v1716 = vsel %vm1715, %v1512, 19
      %vm1717 = vcmp.lt.s32.totalorder %v1514, 19
      %v1718 = vsel %vm1717, %v1514, 19
      %vm1719 = vcmp.lt.s32.totalorder %v1516, 19
      %v1720 = vsel %vm1719, %v1516, 19
      %vm1721 = vcmp.lt.s32.totalorder %v1518, 19
      %v1722 = vsel %vm1721, %v1518, 19
      %vm1723 = vcmp.lt.s32.totalorder %v1520, 19
      %v1724 = vsel %vm1723, %v1520, 19
      %vm1725 = vcmp.lt.s32.totalorder %v1522, 19
      %v1726 = vsel %vm1725, %v1522, 19
      %vm1727 = vcmp.lt.s32.totalorder %v1524, 19
      %v1728 = vsel %vm1727, %v1524, 19
      %vm1729 = vcmp.lt.s32.totalorder %v1526, 19
      %v1730 = vsel %vm1729, %v1526, 19
      %vm1731 = vcmp.lt.s32.totalorder %v1528, 19
      %v1732 = vsel %vm1731, %v1528, 19
      %vm1733 = vcmp.lt.s32.totalorder %v1530, 19
      %v1734 = vsel %vm1733, %v1530, 19
      %vm1735 = vcmp.lt.s32.totalorder %v1532, 19
      %v1736 = vsel %vm1735, %v1532, 19
      %vm1737 = vcmp.lt.s32.totalorder %v1534, 19
      %v1738 = vsel %vm1737, %v1534, 19
      %vm1739 = vcmp.lt.s32.totalorder %v1536, 19
      %v1740 = vsel %vm1739, %v1536, 19
      %vm1741 = vcmp.lt.s32.totalorder %v1538, 19
      %v1742 = vsel %vm1741, %v1538, 19
      %vm1743 = vcmp.lt.s32.totalorder %v1540, 19
      %v1744 = vsel %vm1743, %v1540, 19
      %vm1745 = vcmp.lt.s32.totalorder %v1542, 19
      %v1746 = vsel %vm1745, %v1542, 19
      %vm1747 = vcmp.lt.s32.totalorder %v1544, 19
      %v1748 = vsel %vm1747, %v1544, 19
      %vm1749 = vcmp.lt.s32.totalorder %v1546, 19
      %v1750 = vsel %vm1749, %v1546, 19
      %vm1751 = vcmp.lt.s32.totalorder %v1548, 19
      %v1752 = vsel %vm1751, %v1548, 19
      %vm1753 = vcmp.lt.s32.totalorder %v1550, 19
      %v1754 = vsel %vm1753, %v1550, 19
      %vm1755 = vcmp.lt.s32.totalorder %v1552, 19
      %v1756 = vsel %vm1755, %v1552, 19
      %vm1757 = vcmp.lt.s32.totalorder %v1554, 19
      %v1758 = vsel %vm1757, %v1554, 19
      %vm1759 = vcmp.lt.s32.totalorder %v1556, 19
      %v1760 = vsel %vm1759, %v1556, 19
      %vm1761 = vcmp.lt.s32.totalorder %v1558, 19
      %v1762 = vsel %vm1761, %v1558, 19
      %vm1763 = vcmp.lt.s32.totalorder %v1560, 19
      %v1764 = vsel %vm1763, %v1560, 19
      %vm1765 = vcmp.lt.s32.totalorder %v1562, 19
      %v1766 = vsel %vm1765, %v1562, 19
      %vm1767 = vcmp.lt.s32.totalorder %v1564, 19
      %v1768 = vsel %vm1767, %v1564, 19
      %vm1769 = vcmp.lt.s32.totalorder %v1566, 19
      %v1770 = vsel %vm1769, %v1566, 19
      %vm1771 = vcmp.lt.s32.totalorder %v1568, 19
      %v1772 = vsel %vm1771, %v1568, 19
      %vm1773 = vcmp.lt.s32.totalorder %v1570, 19
      %v1774 = vsel %vm1773, %v1570, 19
      %vm1775 = vcmp.lt.s32.totalorder %v1572, 19
      %v1776 = vsel %vm1775, %v1572, 19
      %vm1777 = vcmp.lt.s32.totalorder %v1574, 19
      %v1778 = vsel %vm1777, %v1574, 19
      %vm1779 = vcmp.lt.s32.totalorder %v1576, 19
      %v1780 = vsel %vm1779, %v1576, 19
      %1781 = vst [vmem:[%s148] sm:$0xff] %v1578
      %1782 = vst [vmem:[%s148 + $0x8] sm:$0xff] %v1580
      %1783 = vst [vmem:[%s148 + $0x10] sm:$0xff] %v1582
      %1784 = vst [vmem:[%s148 + $0x18] sm:$0xff] %v1584
      %1785 = vst [vmem:[%s148 + $0x20] sm:$0xff] %v1586
      %1786 = vst [vmem:[%s148 + $0x28] sm:$0xff] %v1588
      %1787 = vst [vmem:[%s148 + $0x30] sm:$0xff] %v1590
      %1788 = vst [vmem:[%s148 + $0x38] sm:$0xff] %v1592
      %1789 = vst [vmem:[%s148 + $0x40] sm:$0xff] %v1594
      %1790 = vst [vmem:[%s148 + $0x48] sm:$0xff] %v1596
      %1791 = vst [vmem:[%s148 + $0x50] sm:$0xff] %v1598
      %1792 = vst [vmem:[%s148 + $0x58] sm:$0xff] %v1600
      %1793 = vst [vmem:[%s148 + $0x60] sm:$0xff] %v1602
      %1794 = vst [vmem:[%s148 + $0x68] sm:$0xff] %v1604
      %1795 = vst [vmem:[%s148 + $0x70] sm:$0xff] %v1606
      %1796 = vst [vmem:[%s148 + $0x78] sm:$0xff] %v1608
      %1797 = vst [vmem:[%s148 + $0x80] sm:$0xff] %v1610
      %1798 = vst [vmem:[%s148 + $0x88] sm:$0xff] %v1612
      %1799 = vst [vmem:[%s148 + $0x90] sm:$0xff] %v1614
      %1800 = vst [vmem:[%s148 + $0x98] sm:$0xff] %v1616
      %1801 = vst [vmem:[%s148 + $0xa0] sm:$0xff] %v1618
      %1802 = vst [vmem:[%s148 + $0xa8] sm:$0xff] %v1620
      %1803 = vst [vmem:[%s148 + $0xb0] sm:$0xff] %v1622
      %1804 = vst [vmem:[%s148 + $0xb8] sm:$0xff] %v1624
      %1805 = vst [vmem:[%s148 + $0xc0] sm:$0xff] %v1626
      %1806 = vst [vmem:[%s148 + $0xc8] sm:$0xff] %v1628
      %1807 = vst [vmem:[%s148 + $0xd0] sm:$0xff] %v1630
      %1808 = vst [vmem:[%s148 + $0xd8] sm:$0xff] %v1632
      %1809 = vst [vmem:[%s148 + $0xe0] sm:$0xff] %v1634
      %1810 = vst [vmem:[%s148 + $0xe8] sm:$0xff] %v1636
      %1811 = vst [vmem:[%s148 + $0xf0] sm:$0xff] %v1638
      %1812 = vst [vmem:[%s148 + $0xf8] sm:$0xff] %v1640
      %1813 = vst [vmem:[%s148 + $0x100] sm:$0xff] %v1642
      %1814 = vst [vmem:[%s148 + $0x108] sm:$0xff] %v1644
      %1815 = vst [vmem:[%s148 + $0x110] sm:$0xff] %v1646
      %1816 = vst [vmem:[%s148 + $0x118] sm:$0xff] %v1648
      %1817 = vst [vmem:[%s148 + $0x120] sm:$0xff] %v1650
      %1818 = vst [vmem:[%s148 + $0x128] sm:$0xff] %v1652
      %1819 = vst [vmem:[%s148 + $0x130] sm:$0xff] %v1654
      %1820 = vst [vmem:[%s148 + $0x138] sm:$0xff] %v1656
      %1821 = vst [vmem:[%s148 + $0x140] sm:$0xff] %v1658
      %1822 = vst [vmem:[%s148 + $0x148] sm:$0xff] %v1660
      %1823 = vst [vmem:[%s148 + $0x150] sm:$0xff] %v1662
      %1824 = vst [vmem:[%s148 + $0x158] sm:$0xff] %v1664
      %1825 = vst [vmem:[%s148 + $0x160] sm:$0xff] %v1666
      %1826 = vst [vmem:[%s148 + $0x168] sm:$0xff] %v1668
      %1827 = vst [vmem:[%s148 + $0x170] sm:$0xff] %v1670
      %1828 = vst [vmem:[%s148 + $0x178] sm:$0xff] %v1672
      %1829 = vst [vmem:[%s148 + $0x180] sm:$0xff] %v1674
      %1830 = vst [vmem:[%s148 + $0x188] sm:$0xff] %v1676
      %1831 = vst [vmem:[%s148 + $0x190] sm:$0xff] %v1678
      %1832 = vst [vmem:[%s148 + $0x198] sm:$0xff] %v1680
      %1833 = vst [vmem:[%s148 + $0x1a0] sm:$0xff] %v1682
      %1834 = vst [vmem:[%s148 + $0x1a8] sm:$0xff] %v1684
      %1835 = vst [vmem:[%s148 + $0x1b0] sm:$0xff] %v1686
      %1836 = vst [vmem:[%s148 + $0x1b8] sm:$0xff] %v1688
      %1837 = vst [vmem:[%s148 + $0x1c0] sm:$0xff] %v1690
      %1838 = vst [vmem:[%s148 + $0x1c8] sm:$0xff] %v1692
      %1839 = vst [vmem:[%s148 + $0x1d0] sm:$0xff] %v1694
      %1840 = vst [vmem:[%s148 + $0x1d8] sm:$0xff] %v1696
      %1841 = vst [vmem:[%s148 + $0x1e0] sm:$0xff] %v1698
      %1842 = vst [vmem:[%s148 + $0x1e8] sm:$0xff] %v1700
      %1843 = vst [vmem:[%s148 + $0x1f0] sm:$0xff] %v1702
      %1844 = vst [vmem:[%s148 + $0x1f8] sm:$0xff] %v1704
      %1845 = vst [vmem:[%s148 + $0x200] sm:$0xff] %v1706
      %1846 = vst [vmem:[%s148 + $0x208] sm:$0xff] %v1708
      %1847 = vst [vmem:[%s148 + $0x210] sm:$0xff] %v1710
      %1848 = vst [vmem:[%s148 + $0x218] sm:$0xff] %v1712
      %1849 = vst [vmem:[%s148 + $0x220] sm:$0xff] %v1714
      %1850 = vst [vmem:[%s148 + $0x228] sm:$0xff] %v1716
      %1851 = vst [vmem:[%s148 + $0x230] sm:$0xff] %v1718
      %1852 = vst [vmem:[%s148 + $0x238] sm:$0xff] %v1720
      %1853 = vst [vmem:[%s148 + $0x240] sm:$0xff] %v1722
      %1854 = vst [vmem:[%s148 + $0x248] sm:$0xff] %v1724
      %1855 = vst [vmem:[%s148 + $0x250] sm:$0xff] %v1726
      %1856 = vst [vmem:[%s148 + $0x258] sm:$0xff] %v1728
      %1857 = vst [vmem:[%s148 + $0x260] sm:$0xff] %v1730
      %1858 = vst [vmem:[%s148 + $0x268] sm:$0xff] %v1732
      %1859 = vst [vmem:[%s148 + $0x270] sm:$0xff] %v1734
      %1860 = vst [vmem:[%s148 + $0x278] sm:$0xff] %v1736
      %1861 = vst [vmem:[%s148 + $0x280] sm:$0xff] %v1738
      %1862 = vst [vmem:[%s148 + $0x288] sm:$0xff] %v1740
      %1863 = vst [vmem:[%s148 + $0x290] sm:$0xff] %v1742
      %1864 = vst [vmem:[%s148 + $0x298] sm:$0xff] %v1744
      %1865 = vst [vmem:[%s148 + $0x2a0] sm:$0xff] %v1746
      %1866 = vst [vmem:[%s148 + $0x2a8] sm:$0xff] %v1748
      %1867 = vst [vmem:[%s148 + $0x2b0] sm:$0xff] %v1750
      %1868 = vst [vmem:[%s148 + $0x2b8] sm:$0xff] %v1752
      %1869 = vst [vmem:[%s148 + $0x2c0] sm:$0xff] %v1754
      %1870 = vst [vmem:[%s148 + $0x2c8] sm:$0xff] %v1756
      %1871 = vst [vmem:[%s148 + $0x2d0] sm:$0xff] %v1758
      %1872 = vst [vmem:[%s148 + $0x2d8] sm:$0xff] %v1760
      %1873 = vst [vmem:[%s148 + $0x2e0] sm:$0xff] %v1762
      %1874 = vst [vmem:[%s148 + $0x2e8] sm:$0xff] %v1764
      %1875 = vst [vmem:[%s148 + $0x2f0] sm:$0xff] %v1766
      %1876 = vst [vmem:[%s148 + $0x2f8] sm:$0xff] %v1768
      %1877 = vst [vmem:[%s148 + $0x300] sm:$0xff] %v1770
      %1878 = vst [vmem:[%s148 + $0x308] sm:$0xff] %v1772
      %1879 = vst [vmem:[%s148 + $0x310] sm:$0xff] %v1774
      %1880 = vst [vmem:[%s148 + $0x318] sm:$0xff] %v1776
      %1881 = vst [vmem:[%s148 + $0x320] sm:$0xff] %v1778
      %1882 = vst [vmem:[%s148 + $0x328] sm:$0xff] %v1780
      %s1883 = smul.u32 102, %s13
      %p1884 = scmp.lt.s32.totalorder %s1883, 203
      %s1885 = scalar_select %p1884, %s1883, 203
      %s1886 = smul.addr %s1885, 8
      %s1887 = scalar_lea.vmem %s2, %s1886
      // Predicated region
      $region29: #{store.1} parent=27 // pred_check
        %p1888 = pneg %p78
      $region30: #{store.1} parent=27 // pred_check_branch
        %1890 = sbr.rel (%p1888) target = $region32
      $region31: #{store.1} parent=27 // pred_region
        %s1891 = smul.u32 102, %s13
      $region32: #{store.1} parent=27 // pred_fallthru
        _
    $region28: #{store.1} parent=5 // pred_fallthru
      _
    %p1892 = scmp.le.s32.totalorder 2, %s8
    // Predicated region
    $region33: #{store.1} parent=5 // pred_check
      %p1893 = pneg %p1892
    $region34: #{store.1} parent=5 // pred_check_branch
      %1895 = sbr.rel (%p1893) target = $region36
    $region35: #{store.1} parent=5 // pred_region
      %s1896 = ssub.s32 %s8, 2
      // Predicated region
      $region37: #{store.1} parent=35 // pred_check
        %p1897 = pneg %p84
      $region38: #{store.1} parent=35 // pred_check_branch
        %1899 = sbr.rel (%p1897) target = $region40
      $region39: #{store.1} parent=35 // pred_region
        %s1900 = smul.u32 102, %s14
        %p1901 = scmp.lt.s32.totalorder %s1900, 203
        %s1902 = scalar_select %p1901, %s1900, 203
        %s1903 = smul.addr %s1902, 8
        %s1904 = scalar_lea.vmem %s2, %s1903
      $region40: #{store.1} parent=35 // pred_fallthru
        _
    $region36: #{store.1} parent=5 // pred_fallthru
      _
  $region6: #{store.1} parent=0 // loop_footer
    %s12 = sadd.s32 1, %s8
  $region7: #{store.1} parent=0 // loop_footer_branch
    %7 = sbr.rel target = $region3
  $region8: #{store.1} parent=0 // loop_exit
    _

</llo_original>
